<compile_context>
chip_gen: v5e
topology: v5e:2x2
jax: 0.10.0
libtpu: 0.0.40
codegen_flags: <defaults>
</compile_context>

<pallas_src>
import functools

import jax
import jax.numpy as jnp
from jax.experimental import pallas as pl
from jax.experimental.pallas import tpu as pltpu


# ----------------------------------------------------------------------------
# VMEM sizing helpers
# ----------------------------------------------------------------------------

def _round_up(v, m):
    return ((v + m - 1) // m) * m


def _padded_bytes(shape, itemsize):
    """VMEM footprint of a buffer with (8, 128) tile padding on the minor dims."""
    dims = list(shape)
    if len(dims) >= 1:
        dims[-1] = _round_up(dims[-1], 128)
    if len(dims) >= 2:
        dims[-2] = _round_up(dims[-2], 8)
    n = 1
    for d in dims:
        n *= d
    return n * itemsize


def _vmem_estimate(B, CT, C, H):
    GH = 4 * H
    return (
        2 * 2 * _padded_bytes((B, CT, C), 2)      # fwd/bwd x chunks, double-buffered, bf16
        + 2 * _padded_bytes((2, C, GH), 2)        # folded input weights (bf16)
        + 2 * _padded_bytes((2, 1, GH), 4)        # folded bias (f32)
        + 2 * _padded_bytes((2, H, GH), 2)        # recurrent weights (bf16)
        + 2 * 2 * _padded_bytes((B, CT, H), 4)    # fwd/bwd output blocks, double-buffered
        + 2 * _padded_bytes((CT, B, GH), 4)       # xp scratches (fwd + bwd)
        + 2 * _padded_bytes((CT, B, H), 4)        # per-step hidden scratches (fwd + bwd)
        + 2 * _padded_bytes((2, B, H), 4)         # h/c carries
    )


def _vmem_capacity_bytes():
    try:
        cap = getattr(pltpu.get_tpu_info(), "vmem_capacity_bytes", None)
        if cap:
            return int(cap)
    except Exception:
        pass
    return 64 * 1024 * 1024  # conservative default (v7x per-core VMEM)


def _pick_chunk(T, B, C, H, budget_bytes):
    """Largest time chunk dividing T whose working set fits the VMEM budget."""
    for ct in (512, 256, 128, 64, 32, 16, 8):
        if T % ct == 0 and _vmem_estimate(B, ct, C, H) <= budget_bytes:
            return ct
    return T  # whole sequence as a single chunk (always a valid divisor of T)


# ----------------------------------------------------------------------------
# Pallas kernel: fused bidirectional LSTM (with folded input projection)
# ----------------------------------------------------------------------------

def _bilstm_kernel(xf_ref, xb_ref, w_ref, b_ref, whh_ref, of_ref, ob_ref,
                   xpf_ref, xpb_ref, hsf_ref, hsb_ref, h_ref, c_ref,
                   *, hidden, chunk, unroll):
    # xf_ref:  (B, CT, C)   bf16  forward-direction input chunk (chunk ci)
    # xb_ref:  (B, CT, C)   bf16  backward-direction input chunk (chunk nc-1-ci)
    # w_ref:   (2, C, 4H)   bf16  folded input weights, gate order (i, f, o, g)
    # b_ref:   (2, 1, 4H)   f32   folded bias
    # whh_ref: (2, H, 4H)   bf16  recurrent weights (transposed), same gate order
    # of_ref:  (B, CT, H)   f32   forward hidden states for chunk ci
    # ob_ref:  (B, CT, H)   f32   backward hidden states for chunk nc-1-ci
    # xpf/xpb: (CT, B, 4H)  f32   time-major per-chunk input projections
    # hsf/hsb: (CT, B, H)   f32   time-major per-step hidden states
    # h_ref/c_ref: (2, B, H) f32  recurrent state carried across chunks
    H = hidden
    GH = 4 * H
    H3 = 3 * H
    CT = chunk
    B = xf_ref.shape[0]
    C = xf_ref.shape[2]
    ci = pl.program_id(0)

    @pl.when(ci == 0)
    def _():
        h_ref[...] = jnp.zeros((2, B, H), jnp.float32)
        c_ref[...] = jnp.zeros((2, B, H), jnp.float32)

    # Per-chunk input projection: one bf16 MXU matmul per direction (f32 acc),
    # stored time-major so the per-step read is a leading-axis dynamic index.
    def project(x_ref, d, xp_ref):
        xp = jnp.dot(x_ref[...].reshape(B * CT, C), w_ref[d],
                     preferred_element_type=jnp.float32)          # (B*CT, 4H)
        xp = xp.reshape(B, CT, GH) + b_ref[d]                     # (B, CT, 4H)
        xp_ref[...] = jnp.transpose(xp, (1, 0, 2))                # (CT, B, 4H)

    project(xf_ref, 0, xpf_ref)
    project(xb_ref, 1, xpb_ref)

    def step(s, carry):
        hf, cf, hb, cb = carry
        rs = CT - 1 - s  # backward walks local time reversed within the chunk
        gf = xpf_ref[s] + jnp.dot(hf.astype(jnp.bfloat16), whh_ref[0],
                                  preferred_element_type=jnp.float32)
        gb = xpb_ref[rs] + jnp.dot(hb.astype(jnp.bfloat16), whh_ref[1],
                                   preferred_element_type=jnp.float32)
        # gate order (i, f, o, g): one wide sigmoid + one tanh per direction
        sf = jax.nn.sigmoid(gf[:, :H3])
        sb = jax.nn.sigmoid(gb[:, :H3])
        ggf = jnp.tanh(gf[:, H3:])
        ggb = jnp.tanh(gb[:, H3:])
        cf = sf[:, H:2 * H] * cf + sf[:, :H] * ggf
        cb = sb[:, H:2 * H] * cb + sb[:, :H] * ggb
        hf = sf[:, 2 * H:] * jnp.tanh(cf)
        hb = sb[:, 2 * H:] * jnp.tanh(cb)
        hsf_ref[s] = hf    # forward-time order
        hsb_ref[rs] = hb   # also ends up in forward-time order
        return hf, cf, hb, cb

    carry0 = (h_ref[0], c_ref[0], h_ref[1], c_ref[1])
    hf, cf, hb, cb = jax.lax.fori_loop(0, CT, step, carry0, unroll=unroll)
    h_ref[0] = hf
    c_ref[0] = cf
    h_ref[1] = hb
    c_ref[1] = cb

    # One lane-dense bulk store per direction per chunk (single transpose each).
    of_ref[...] = jnp.transpose(hsf_ref[...], (1, 0, 2))
    ob_ref[...] = jnp.transpose(hsb_ref[...], (1, 0, 2))


def bidirectional_lstm(x, w_comb, b_comb, whh_t, hidden):
    """x: (B, T, C) f32; w_comb: (2, C, 4H); b_comb: (2, 1, 4H); whh_t: (2, H, 4H).

    Returns (B, T, 2H): [:, :, :H] forward hidden states, [:, :, H:] backward.
    """
    B, T, C = x.shape
    H = hidden
    GH = 4 * H

    cap = _vmem_capacity_bytes()
    CT = _pick_chunk(T, B, C, H, int(0.7 * cap))
    nc = T // CT
    unroll = CT if CT <= 8 else (8 if CT % 8 == 0 else (4 if CT % 4 == 0 else True))
    est = _vmem_estimate(B, CT, C, H)
    vmem_limit = int(min(0.8 * cap, max(4 * est, 32 * 1024 * 1024)))

    kernel = functools.partial(_bilstm_kernel, hidden=H, chunk=CT, unroll=unroll)

    x_bf = x.astype(jnp.bfloat16)
    w_bf = w_comb.astype(jnp.bfloat16)
    whh_bf = whh_t.astype(jnp.bfloat16)

    out_f, out_b = pl.pallas_call(
        kernel,
        out_shape=(jax.ShapeDtypeStruct((B, T, H), jnp.float32),
                   jax.ShapeDtypeStruct((B, T, H), jnp.float32)),
        grid_spec=pltpu.PrefetchScalarGridSpec(
            num_scalar_prefetch=0,
            grid=(nc,),
            in_specs=[
                pl.BlockSpec((B, CT, C), lambda c: (0, c, 0)),
                pl.BlockSpec((B, CT, C), lambda c: (0, nc - 1 - c, 0)),
                pl.BlockSpec((2, C, GH), lambda c: (0, 0, 0)),
                pl.BlockSpec((2, 1, GH), lambda c: (0, 0, 0)),
                pl.BlockSpec((2, H, GH), lambda c: (0, 0, 0)),
            ],
            out_specs=[
                pl.BlockSpec((B, CT, H), lambda c: (0, c, 0)),
                pl.BlockSpec((B, CT, H), lambda c: (0, nc - 1 - c, 0)),
            ],
            scratch_shapes=[
                pltpu.VMEM((CT, B, GH), jnp.float32),   # xp fwd
                pltpu.VMEM((CT, B, GH), jnp.float32),   # xp bwd
                pltpu.VMEM((CT, B, H), jnp.float32),    # hidden history fwd
                pltpu.VMEM((CT, B, H), jnp.float32),    # hidden history bwd
                pltpu.VMEM((2, B, H), jnp.float32),     # h carry
                pltpu.VMEM((2, B, H), jnp.float32),     # c carry
            ],
        ),
        compiler_params=pltpu.CompilerParams(
            dimension_semantics=("arbitrary",),
            vmem_limit_bytes=vmem_limit,
        ),
    )(x_bf, x_bf, w_bf, b_comb, whh_bf)

    return jnp.concatenate([out_f, out_b], axis=-1)


# ----------------------------------------------------------------------------
# Parameter prep / module wrapper
# ----------------------------------------------------------------------------

def make_params(key, concat_size, input_size, hidden_size):
    ks = jax.random.split(key, 10)
    s = 0.1
    p = {
        "lin_w": jax.random.normal(ks[0], (input_size, concat_size), jnp.float32) * s,
        "lin_b": jax.random.normal(ks[1], (input_size,), jnp.float32) * s,
    }
    for d, off in (("f", 2), ("b", 6)):
        p[f"w_ih_{d}"] = jax.random.normal(ks[off + 0], (4 * hidden_size, input_size), jnp.float32) * s
        p[f"w_hh_{d}"] = jax.random.normal(ks[off + 1], (4 * hidden_size, hidden_size), jnp.float32) * s
        p[f"b_ih_{d}"] = jax.random.normal(ks[off + 2], (4 * hidden_size,), jnp.float32) * s
        p[f"b_hh_{d}"] = jax.random.normal(ks[off + 3], (4 * hidden_size,), jnp.float32) * s
    return p


def _fold_direction(params, tag, hidden):
    """Fold Linear into the LSTM input projection and reorder gates to (i,f,o,g)."""
    H = hidden
    w_ih = params[f"w_ih_{tag}"]                                       # (4H, input)
    w_comb = w_ih @ params["lin_w"]                                    # (4H, concat)
    b_comb = (w_ih @ params["lin_b"]
              + params[f"b_ih_{tag}"] + params[f"b_hh_{tag}"])          # (4H,)
    w_hh = params[f"w_hh_{tag}"]                                       # (4H, H)

    def reorder(m):  # PyTorch gate order (i, f, g, o) -> (i, f, o, g)
        return jnp.concatenate([m[:2 * H], m[3 * H:], m[2 * H:3 * H]], axis=0)

    return reorder(w_comb).T, reorder(b_comb), reorder(w_hh).T


def inference_composition_forward(params, x, hidden_size):
    """x: (B, T, concat_size) f32 -> (B, T, 2*hidden_size) f32 (eval mode)."""
    H = hidden_size
    # TODO(synk): training-mode dropout (p=0.5) would need pltpu PRNG masking and
    # would invalidate the Linear folding; inference mode dropout is identity.
    wf, bf_, whf = _fold_direction(params, "f", H)
    wb, bb_, whb = _fold_direction(params, "b", H)
    w_comb = jnp.stack([wf, wb])                 # (2, C, 4H)
    b_comb = jnp.stack([bf_, bb_])[:, None, :]   # (2, 1, 4H)
    whh_t = jnp.stack([whf, whb])                # (2, H, 4H)
    return bidirectional_lstm(x, w_comb, b_comb, whh_t, H)


# ----------------------------------------------------------------------------
# Pure-JAX reference (unfused, original gate order, for correctness check)
# ----------------------------------------------------------------------------

def reference_forward(params, x, hidden_size):
    H = hidden_size
    y = jnp.einsum("btc,ic->bti", x, params["lin_w"]) + params["lin_b"]

    def run_dir(tag, y_dir):
        xp = jnp.einsum("bti,gi->btg", y_dir, params[f"w_ih_{tag}"]) + (
            params[f"b_ih_{tag}"] + params[f"b_hh_{tag}"]
        )
        B = y_dir.shape[0]

        def step(carry, g_t):
            h, c = carry
            gates = g_t + h @ params[f"w_hh_{tag}"].T
            i = jax.nn.sigmoid(gates[:, 0 * H:1 * H])
            f = jax.nn.sigmoid(gates[:, 1 * H:2 * H])
            g = jnp.tanh(gates[:, 2 * H:3 * H])
            o = jax.nn.sigmoid(gates[:, 3 * H:4 * H])
            c = f * c + i * g
            h = o * jnp.tanh(c)
            return (h, c), h

        init = (jnp.zeros((B, H), jnp.float32), jnp.zeros((B, H), jnp.float32))
        _, hs = jax.lax.scan(step, init, xp.transpose(1, 0, 2))
        return hs.transpose(1, 0, 2)

    h_f = run_dir("f", y)
    h_b = jnp.flip(run_dir("b", jnp.flip(y, axis=1)), axis=1)
    return jnp.concatenate([h_f, h_b], axis=-1)


# ----------------------------------------------------------------------------
# Main
# ----------------------------------------------------------------------------

if __name__ == "__main__":
    B, T = 2, 8
    concat_size, input_size, hidden_size = 32, 16, 8

    key = jax.random.PRNGKey(0)
    k_param, k_x = jax.random.split(key)
    params = make_params(k_param, concat_size, input_size, hidden_size)
    x = jax.random.normal(k_x, (B, T, concat_size), jnp.float32)

    out = jax.block_until_ready(inference_composition_forward(params, x, hidden_size))
    ref = jax.block_until_ready(reference_forward(params, x, hidden_size))

    assert out.shape == (B, T, 2 * hidden_size), out.shape
    err = float(jnp.max(jnp.abs(out - ref)))
    # bf16 matmul inputs (f32 accumulation) => small numerical difference vs f32 ref.
    assert err < 2e-2, err

    print("KERNEL_OK")
</pallas_src>

<mosaic_0001>
module attributes {stable_mosaic.version = 11 : i64} {
  func.func @_bilstm_kernel(%arg0: i32, %arg1: memref<2x8x32xbf16, #tpu.memory_space<vmem>>, %arg2: memref<2x8x32xbf16, #tpu.memory_space<vmem>>, %arg3: memref<2x32x32xbf16, #tpu.memory_space<vmem>>, %arg4: memref<2x1x32xf32, #tpu.memory_space<vmem>>, %arg5: memref<2x8x32xbf16, #tpu.memory_space<vmem>>, %arg6: memref<2x8x8xf32, #tpu.memory_space<vmem>>, %arg7: memref<2x8x8xf32, #tpu.memory_space<vmem>>, %arg8: memref<8x2x32xf32, #tpu.memory_space<vmem>>, %arg9: memref<8x2x32xf32, #tpu.memory_space<vmem>>, %arg10: memref<8x2x8xf32, #tpu.memory_space<vmem>>, %arg11: memref<8x2x8xf32, #tpu.memory_space<vmem>>, %arg12: memref<2x2x8xf32, #tpu.memory_space<vmem>>, %arg13: memref<2x2x8xf32, #tpu.memory_space<vmem>>) attributes {dimension_semantics = [#tpu.dimension_semantics<arbitrary>], iteration_bounds = array<i64: 1>, scalar_prefetch = 0 : i64, scratch_operands = 6 : i64, tpu.core_type = #tpu.core_type<tc>, window_params = [{transform_indices = @transform_0, window_bounds = array<i64: 2, 8, 32>}, {transform_indices = @transform_1, window_bounds = array<i64: 2, 8, 32>}, {pipeline_mode = #tpu.pipeline_mode<synchronous>, transform_indices = @transform_2, window_bounds = array<i64: 2, 32, 32>}, {pipeline_mode = #tpu.pipeline_mode<synchronous>, transform_indices = @transform_3, window_bounds = array<i64: 2, 1, 32>}, {pipeline_mode = #tpu.pipeline_mode<synchronous>, transform_indices = @transform_4, window_bounds = array<i64: 2, 8, 32>}, {transform_indices = @transform_5, window_bounds = array<i64: 2, 8, 8>}, {transform_indices = @transform_6, window_bounds = array<i64: 2, 8, 8>}]} {
    %c0_i32 = arith.constant 0 : i32
    %0 = arith.cmpi eq, %arg0, %c0_i32 : i32
    %1 = arith.extui %0 : i1 to i32
    %c0_i32_0 = arith.constant 0 : i32
    %2 = arith.cmpi ne, %1, %c0_i32_0 : i32
    scf.if %2 {
      %cst_213 = arith.constant 0.000000e+00 : f32
      %511 = vector.broadcast %cst_213 : f32 to vector<2x2x8xf32>
      %c0_214 = arith.constant 0 : index
      %c0_215 = arith.constant 0 : index
      %c0_216 = arith.constant 0 : index
      %512 = vector.load %arg12[%c0_214, %c0_215, %c0_216] : memref<2x2x8xf32, #tpu.memory_space<vmem>>, vector<2x2x8xf32>
      tpu.vector_store %arg12[%c0_214, %c0_215, %c0_216], %511 {strides = array<i32>} : memref<2x2x8xf32, #tpu.memory_space<vmem>>, vector<2x2x8xf32>,
      %cst_217 = arith.constant 0.000000e+00 : f32
      %513 = vector.broadcast %cst_217 : f32 to vector<2x2x8xf32>
      %c0_218 = arith.constant 0 : index
      %c0_219 = arith.constant 0 : index
      %c0_220 = arith.constant 0 : index
      %514 = vector.load %arg13[%c0_218, %c0_219, %c0_220] : memref<2x2x8xf32, #tpu.memory_space<vmem>>, vector<2x2x8xf32>
      tpu.vector_store %arg13[%c0_218, %c0_219, %c0_220], %513 {strides = array<i32>} : memref<2x2x8xf32, #tpu.memory_space<vmem>>, vector<2x2x8xf32>,
    } else {
    }
    %c0 = arith.constant 0 : index
    %c0_1 = arith.constant 0 : index
    %c0_2 = arith.constant 0 : index
    %3 = vector.load %arg1[%c0, %c0_1, %c0_2] : memref<2x8x32xbf16, #tpu.memory_space<vmem>>, vector<2x8x32xbf16>
    %4 = vector.shape_cast %3 : vector<2x8x32xbf16> to vector<16x32xbf16>
    %c0_3 = arith.constant 0 : index
    %c0_4 = arith.constant 0 : index
    %c0_5 = arith.constant 0 : index
    %5 = vector.load %arg3[%c0_3, %c0_4, %c0_5] : memref<2x32x32xbf16, #tpu.memory_space<vmem>>, vector<1x32x32xbf16>
    %6 = vector.shape_cast %5 : vector<1x32x32xbf16> to vector<32x32xbf16>
    %cst = arith.constant dense<0.000000e+00> : vector<16x32xf32>
    %7 = tpu.matmul %4, %6, %cst {dimension_numbers = #tpu.dot_dimension_numbers<[1], [0], [0], [1], [0, 0, 1, 1], [], []>} : vector<16x32xbf16>, vector<32x32xbf16>, vector<16x32xf32> -> vector<16x32xf32>
    %8 = vector.shape_cast %7 : vector<16x32xf32> to vector<2x8x32xf32>
    %c0_6 = arith.constant 0 : index
    %c0_7 = arith.constant 0 : index
    %c0_8 = arith.constant 0 : index
    %9 = vector.load %arg4[%c0_6, %c0_7, %c0_8] : memref<2x1x32xf32, #tpu.memory_space<vmem>>, vector<1x1x32xf32>
    %10 = vector.shape_cast %9 : vector<1x1x32xf32> to vector<1x32xf32>
    %11 = vector.shape_cast %10 : vector<1x32xf32> to vector<1x1x32xf32>
    %12 = vector.broadcast %11 : vector<1x1x32xf32> to vector<2x8x32xf32>
    %13 = arith.addf %8, %12 : vector<2x8x32xf32>
    %14 = tpu.transpose %13, [1, 0, 2] : vector<2x8x32xf32> -> vector<8x2x32xf32>
    %c0_9 = arith.constant 0 : index
    %c0_10 = arith.constant 0 : index
    %c0_11 = arith.constant 0 : index
    %15 = vector.load %arg8[%c0_9, %c0_10, %c0_11] : memref<8x2x32xf32, #tpu.memory_space<vmem>>, vector<8x2x32xf32>
    tpu.vector_store %arg8[%c0_9, %c0_10, %c0_11], %14 {strides = array<i32>} : memref<8x2x32xf32, #tpu.memory_space<vmem>>, vector<8x2x32xf32>,
    %c0_12 = arith.constant 0 : index
    %c0_13 = arith.constant 0 : index
    %c0_14 = arith.constant 0 : index
    %16 = vector.load %arg2[%c0_12, %c0_13, %c0_14] : memref<2x8x32xbf16, #tpu.memory_space<vmem>>, vector<2x8x32xbf16>
    %17 = vector.shape_cast %16 : vector<2x8x32xbf16> to vector<16x32xbf16>
    %c1 = arith.constant 1 : index
    %c0_15 = arith.constant 0 : index
    %c0_16 = arith.constant 0 : index
    %18 = vector.load %arg3[%c1, %c0_15, %c0_16] : memref<2x32x32xbf16, #tpu.memory_space<vmem>>, vector<1x32x32xbf16>
    %19 = vector.shape_cast %18 : vector<1x32x32xbf16> to vector<32x32xbf16>
    %cst_17 = arith.constant dense<0.000000e+00> : vector<16x32xf32>
    %20 = tpu.matmul %17, %19, %cst_17 {dimension_numbers = #tpu.dot_dimension_numbers<[1], [0], [0], [1], [0, 0, 1, 1], [], []>} : vector<16x32xbf16>, vector<32x32xbf16>, vector<16x32xf32> -> vector<16x32xf32>
    %21 = vector.shape_cast %20 : vector<16x32xf32> to vector<2x8x32xf32>
    %c1_18 = arith.constant 1 : index
    %c0_19 = arith.constant 0 : index
    %c0_20 = arith.constant 0 : index
    %22 = vector.load %arg4[%c1_18, %c0_19, %c0_20] : memref<2x1x32xf32, #tpu.memory_space<vmem>>, vector<1x1x32xf32>
    %23 = vector.shape_cast %22 : vector<1x1x32xf32> to vector<1x32xf32>
    %24 = vector.shape_cast %23 : vector<1x32xf32> to vector<1x1x32xf32>
    %25 = vector.broadcast %24 : vector<1x1x32xf32> to vector<2x8x32xf32>
    %26 = arith.addf %21, %25 : vector<2x8x32xf32>
    %27 = tpu.transpose %26, [1, 0, 2] : vector<2x8x32xf32> -> vector<8x2x32xf32>
    %c0_21 = arith.constant 0 : index
    %c0_22 = arith.constant 0 : index
    %c0_23 = arith.constant 0 : index
    %28 = vector.load %arg9[%c0_21, %c0_22, %c0_23] : memref<8x2x32xf32, #tpu.memory_space<vmem>>, vector<8x2x32xf32>
    tpu.vector_store %arg9[%c0_21, %c0_22, %c0_23], %27 {strides = array<i32>} : memref<8x2x32xf32, #tpu.memory_space<vmem>>, vector<8x2x32xf32>,
    %c0_24 = arith.constant 0 : index
    %c0_25 = arith.constant 0 : index
    %c0_26 = arith.constant 0 : index
    %29 = vector.load %arg12[%c0_24, %c0_25, %c0_26] : memref<2x2x8xf32, #tpu.memory_space<vmem>>, vector<1x2x8xf32>
    %30 = vector.shape_cast %29 : vector<1x2x8xf32> to vector<2x8xf32>
    %c0_27 = arith.constant 0 : index
    %c0_28 = arith.constant 0 : index
    %c0_29 = arith.constant 0 : index
    %31 = vector.load %arg13[%c0_27, %c0_28, %c0_29] : memref<2x2x8xf32, #tpu.memory_space<vmem>>, vector<1x2x8xf32>
    %32 = vector.shape_cast %31 : vector<1x2x8xf32> to vector<2x8xf32>
    %c1_30 = arith.constant 1 : index
    %c0_31 = arith.constant 0 : index
    %c0_32 = arith.constant 0 : index
    %33 = vector.load %arg12[%c1_30, %c0_31, %c0_32] : memref<2x2x8xf32, #tpu.memory_space<vmem>>, vector<1x2x8xf32>
    %34 = vector.shape_cast %33 : vector<1x2x8xf32> to vector<2x8xf32>
    %c1_33 = arith.constant 1 : index
    %c0_34 = arith.constant 0 : index
    %c0_35 = arith.constant 0 : index
    %35 = vector.load %arg13[%c1_33, %c0_34, %c0_35] : memref<2x2x8xf32, #tpu.memory_space<vmem>>, vector<1x2x8xf32>
    %36 = vector.shape_cast %35 : vector<1x2x8xf32> to vector<2x8xf32>
    %c0_i32_36 = arith.constant 0 : i32
    %c7_i32 = arith.constant 7 : i32
    %37 = arith.subi %c7_i32, %c0_i32_36 : i32
    %38 = arith.index_cast %c0_i32_36 : i32 to index
    %c0_37 = arith.constant 0 : index
    %c0_38 = arith.constant 0 : index
    %39 = vector.load %arg8[%38, %c0_37, %c0_38] : memref<8x2x32xf32, #tpu.memory_space<vmem>>, vector<1x2x32xf32>
    %40 = vector.shape_cast %39 : vector<1x2x32xf32> to vector<2x32xf32>
    %41 = arith.truncf %30 : vector<2x8xf32> to vector<2x8xbf16>
    %c0_39 = arith.constant 0 : index
    %c0_40 = arith.constant 0 : index
    %c0_41 = arith.constant 0 : index
    %42 = vector.load %arg5[%c0_39, %c0_40, %c0_41] : memref<2x8x32xbf16, #tpu.memory_space<vmem>>, vector<1x8x32xbf16>
    %43 = vector.shape_cast %42 : vector<1x8x32xbf16> to vector<8x32xbf16>
    %cst_42 = arith.constant dense<0.000000e+00> : vector<2x32xf32>
    %44 = tpu.matmul %41, %43, %cst_42 {dimension_numbers = #tpu.dot_dimension_numbers<[1], [0], [0], [1], [0, 0, 1, 1], [], []>} : vector<2x8xbf16>, vector<8x32xbf16>, vector<2x32xf32> -> vector<2x32xf32>
    %45 = arith.addf %40, %44 : vector<2x32xf32>
    %46 = arith.index_cast %37 : i32 to index
    %c0_43 = arith.constant 0 : index
    %c0_44 = arith.constant 0 : index
    %47 = vector.load %arg9[%46, %c0_43, %c0_44] : memref<8x2x32xf32, #tpu.memory_space<vmem>>, vector<1x2x32xf32>
    %48 = vector.shape_cast %47 : vector<1x2x32xf32> to vector<2x32xf32>
    %49 = arith.truncf %34 : vector<2x8xf32> to vector<2x8xbf16>
    %c1_45 = arith.constant 1 : index
    %c0_46 = arith.constant 0 : index
    %c0_47 = arith.constant 0 : index
    %50 = vector.load %arg5[%c1_45, %c0_46, %c0_47] : memref<2x8x32xbf16, #tpu.memory_space<vmem>>, vector<1x8x32xbf16>
    %51 = vector.shape_cast %50 : vector<1x8x32xbf16> to vector<8x32xbf16>
    %cst_48 = arith.constant dense<0.000000e+00> : vector<2x32xf32>
    %52 = tpu.matmul %49, %51, %cst_48 {dimension_numbers = #tpu.dot_dimension_numbers<[1], [0], [0], [1], [0, 0, 1, 1], [], []>} : vector<2x8xbf16>, vector<8x32xbf16>, vector<2x32xf32> -> vector<2x32xf32>
    %53 = arith.addf %48, %52 : vector<2x32xf32>
    %54 = vector.extract_strided_slice %45 {offsets = [0, 0], sizes = [2, 24], strides = [1, 1]} : vector<2x32xf32> to vector<2x24xf32>
    %55 = arith.negf %54 : vector<2x24xf32>
    %56 = math.exp %55 : vector<2x24xf32>
    %cst_49 = arith.constant 1.000000e+00 : f32
    %57 = vector.broadcast %cst_49 : f32 to vector<2x24xf32>
    %58 = arith.addf %57, %56 : vector<2x24xf32>
    %59 = arith.divf %57, %58 : vector<2x24xf32>
    %60 = vector.extract_strided_slice %53 {offsets = [0, 0], sizes = [2, 24], strides = [1, 1]} : vector<2x32xf32> to vector<2x24xf32>
    %61 = arith.negf %60 : vector<2x24xf32>
    %62 = math.exp %61 : vector<2x24xf32>
    %cst_50 = arith.constant 1.000000e+00 : f32
    %63 = vector.broadcast %cst_50 : f32 to vector<2x24xf32>
    %64 = arith.addf %63, %62 : vector<2x24xf32>
    %65 = arith.divf %63, %64 : vector<2x24xf32>
    %66 = vector.extract_strided_slice %45 {offsets = [0, 24], sizes = [2, 8], strides = [1, 1]} : vector<2x32xf32> to vector<2x8xf32>
    %67 = math.tanh %66 : vector<2x8xf32>
    %68 = vector.extract_strided_slice %53 {offsets = [0, 24], sizes = [2, 8], strides = [1, 1]} : vector<2x32xf32> to vector<2x8xf32>
    %69 = math.tanh %68 : vector<2x8xf32>
    %70 = vector.extract_strided_slice %59 {offsets = [0, 8], sizes = [2, 8], strides = [1, 1]} : vector<2x24xf32> to vector<2x8xf32>
    %71 = arith.mulf %70, %32 : vector<2x8xf32>
    %72 = vector.extract_strided_slice %59 {offsets = [0, 0], sizes = [2, 8], strides = [1, 1]} : vector<2x24xf32> to vector<2x8xf32>
    %73 = arith.mulf %72, %67 : vector<2x8xf32>
    %74 = arith.addf %71, %73 : vector<2x8xf32>
    %75 = vector.extract_strided_slice %65 {offsets = [0, 8], sizes = [2, 8], strides = [1, 1]} : vector<2x24xf32> to vector<2x8xf32>
    %76 = arith.mulf %75, %36 : vector<2x8xf32>
    %77 = vector.extract_strided_slice %65 {offsets = [0, 0], sizes = [2, 8], strides = [1, 1]} : vector<2x24xf32> to vector<2x8xf32>
    %78 = arith.mulf %77, %69 : vector<2x8xf32>
    %79 = arith.addf %76, %78 : vector<2x8xf32>
    %80 = vector.extract_strided_slice %59 {offsets = [0, 16], sizes = [2, 8], strides = [1, 1]} : vector<2x24xf32> to vector<2x8xf32>
    %81 = math.tanh %74 : vector<2x8xf32>
    %82 = arith.mulf %80, %81 : vector<2x8xf32>
    %83 = vector.extract_strided_slice %65 {offsets = [0, 16], sizes = [2, 8], strides = [1, 1]} : vector<2x24xf32> to vector<2x8xf32>
    %84 = math.tanh %79 : vector<2x8xf32>
    %85 = arith.mulf %83, %84 : vector<2x8xf32>
    %86 = arith.index_cast %c0_i32_36 : i32 to index
    %c0_51 = arith.constant 0 : index
    %c0_52 = arith.constant 0 : index
    %87 = vector.load %arg10[%86, %c0_51, %c0_52] : memref<8x2x8xf32, #tpu.memory_space<vmem>>, vector<1x2x8xf32>
    %88 = vector.shape_cast %87 : vector<1x2x8xf32> to vector<2x8xf32>
    %89 = vector.shape_cast %82 : vector<2x8xf32> to vector<1x2x8xf32>
    tpu.vector_store %arg10[%86, %c0_51, %c0_52], %89 {strides = array<i32>} : memref<8x2x8xf32, #tpu.memory_space<vmem>>, vector<1x2x8xf32>,
    %90 = arith.index_cast %37 : i32 to index
    %c0_53 = arith.constant 0 : index
    %c0_54 = arith.constant 0 : index
    %91 = vector.load %arg11[%90, %c0_53, %c0_54] : memref<8x2x8xf32, #tpu.memory_space<vmem>>, vector<1x2x8xf32>
    %92 = vector.shape_cast %91 : vector<1x2x8xf32> to vector<2x8xf32>
    %93 = vector.shape_cast %85 : vector<2x8xf32> to vector<1x2x8xf32>
    tpu.vector_store %arg11[%90, %c0_53, %c0_54], %93 {strides = array<i32>} : memref<8x2x8xf32, #tpu.memory_space<vmem>>, vector<1x2x8xf32>,
    %c1_i32 = arith.constant 1 : i32
    %c7_i32_55 = arith.constant 7 : i32
    %94 = arith.subi %c7_i32_55, %c1_i32 : i32
    %95 = arith.index_cast %c1_i32 : i32 to index
    %c0_56 = arith.constant 0 : index
    %c0_57 = arith.constant 0 : index
    %96 = vector.load %arg8[%95, %c0_56, %c0_57] : memref<8x2x32xf32, #tpu.memory_space<vmem>>, vector<1x2x32xf32>
    %97 = vector.shape_cast %96 : vector<1x2x32xf32> to vector<2x32xf32>
    %98 = arith.truncf %82 : vector<2x8xf32> to vector<2x8xbf16>
    %c0_58 = arith.constant 0 : index
    %c0_59 = arith.constant 0 : index
    %c0_60 = arith.constant 0 : index
    %99 = vector.load %arg5[%c0_58, %c0_59, %c0_60] : memref<2x8x32xbf16, #tpu.memory_space<vmem>>, vector<1x8x32xbf16>
    %100 = vector.shape_cast %99 : vector<1x8x32xbf16> to vector<8x32xbf16>
    %cst_61 = arith.constant dense<0.000000e+00> : vector<2x32xf32>
    %101 = tpu.matmul %98, %100, %cst_61 {dimension_numbers = #tpu.dot_dimension_numbers<[1], [0], [0], [1], [0, 0, 1, 1], [], []>} : vector<2x8xbf16>, vector<8x32xbf16>, vector<2x32xf32> -> vector<2x32xf32>
    %102 = arith.addf %97, %101 : vector<2x32xf32>
    %103 = arith.index_cast %94 : i32 to index
    %c0_62 = arith.constant 0 : index
    %c0_63 = arith.constant 0 : index
    %104 = vector.load %arg9[%103, %c0_62, %c0_63] : memref<8x2x32xf32, #tpu.memory_space<vmem>>, vector<1x2x32xf32>
    %105 = vector.shape_cast %104 : vector<1x2x32xf32> to vector<2x32xf32>
    %106 = arith.truncf %85 : vector<2x8xf32> to vector<2x8xbf16>
    %c1_64 = arith.constant 1 : index
    %c0_65 = arith.constant 0 : index
    %c0_66 = arith.constant 0 : index
    %107 = vector.load %arg5[%c1_64, %c0_65, %c0_66] : memref<2x8x32xbf16, #tpu.memory_space<vmem>>, vector<1x8x32xbf16>
    %108 = vector.shape_cast %107 : vector<1x8x32xbf16> to vector<8x32xbf16>
    %cst_67 = arith.constant dense<0.000000e+00> : vector<2x32xf32>
    %109 = tpu.matmul %106, %108, %cst_67 {dimension_numbers = #tpu.dot_dimension_numbers<[1], [0], [0], [1], [0, 0, 1, 1], [], []>} : vector<2x8xbf16>, vector<8x32xbf16>, vector<2x32xf32> -> vector<2x32xf32>
    %110 = arith.addf %105, %109 : vector<2x32xf32>
    %111 = vector.extract_strided_slice %102 {offsets = [0, 0], sizes = [2, 24], strides = [1, 1]} : vector<2x32xf32> to vector<2x24xf32>
    %112 = arith.negf %111 : vector<2x24xf32>
    %113 = math.exp %112 : vector<2x24xf32>
    %cst_68 = arith.constant 1.000000e+00 : f32
    %114 = vector.broadcast %cst_68 : f32 to vector<2x24xf32>
    %115 = arith.addf %114, %113 : vector<2x24xf32>
    %116 = arith.divf %114, %115 : vector<2x24xf32>
    %117 = vector.extract_strided_slice %110 {offsets = [0, 0], sizes = [2, 24], strides = [1, 1]} : vector<2x32xf32> to vector<2x24xf32>
    %118 = arith.negf %117 : vector<2x24xf32>
    %119 = math.exp %118 : vector<2x24xf32>
    %cst_69 = arith.constant 1.000000e+00 : f32
    %120 = vector.broadcast %cst_69 : f32 to vector<2x24xf32>
    %121 = arith.addf %120, %119 : vector<2x24xf32>
    %122 = arith.divf %120, %121 : vector<2x24xf32>
    %123 = vector.extract_strided_slice %102 {offsets = [0, 24], sizes = [2, 8], strides = [1, 1]} : vector<2x32xf32> to vector<2x8xf32>
    %124 = math.tanh %123 : vector<2x8xf32>
    %125 = vector.extract_strided_slice %110 {offsets = [0, 24], sizes = [2, 8], strides = [1, 1]} : vector<2x32xf32> to vector<2x8xf32>
    %126 = math.tanh %125 : vector<2x8xf32>
    %127 = vector.extract_strided_slice %116 {offsets = [0, 8], sizes = [2, 8], strides = [1, 1]} : vector<2x24xf32> to vector<2x8xf32>
    %128 = arith.mulf %127, %74 : vector<2x8xf32>
    %129 = vector.extract_strided_slice %116 {offsets = [0, 0], sizes = [2, 8], strides = [1, 1]} : vector<2x24xf32> to vector<2x8xf32>
    %130 = arith.mulf %129, %124 : vector<2x8xf32>
    %131 = arith.addf %128, %130 : vector<2x8xf32>
    %132 = vector.extract_strided_slice %122 {offsets = [0, 8], sizes = [2, 8], strides = [1, 1]} : vector<2x24xf32> to vector<2x8xf32>
    %133 = arith.mulf %132, %79 : vector<2x8xf32>
    %134 = vector.extract_strided_slice %122 {offsets = [0, 0], sizes = [2, 8], strides = [1, 1]} : vector<2x24xf32> to vector<2x8xf32>
    %135 = arith.mulf %134, %126 : vector<2x8xf32>
    %136 = arith.addf %133, %135 : vector<2x8xf32>
    %137 = vector.extract_strided_slice %116 {offsets = [0, 16], sizes = [2, 8], strides = [1, 1]} : vector<2x24xf32> to vector<2x8xf32>
    %138 = math.tanh %131 : vector<2x8xf32>
    %139 = arith.mulf %137, %138 : vector<2x8xf32>
    %140 = vector.extract_strided_slice %122 {offsets = [0, 16], sizes = [2, 8], strides = [1, 1]} : vector<2x24xf32> to vector<2x8xf32>
    %141 = math.tanh %136 : vector<2x8xf32>
    %142 = arith.mulf %140, %141 : vector<2x8xf32>
    %143 = arith.index_cast %c1_i32 : i32 to index
    %c0_70 = arith.constant 0 : index
    %c0_71 = arith.constant 0 : index
    %144 = vector.load %arg10[%143, %c0_70, %c0_71] : memref<8x2x8xf32, #tpu.memory_space<vmem>>, vector<1x2x8xf32>
    %145 = vector.shape_cast %144 : vector<1x2x8xf32> to vector<2x8xf32>
    %146 = vector.shape_cast %139 : vector<2x8xf32> to vector<1x2x8xf32>
    tpu.vector_store %arg10[%143, %c0_70, %c0_71], %146 {strides = array<i32>} : memref<8x2x8xf32, #tpu.memory_space<vmem>>, vector<1x2x8xf32>,
    %147 = arith.index_cast %94 : i32 to index
    %c0_72 = arith.constant 0 : index
    %c0_73 = arith.constant 0 : index
    %148 = vector.load %arg11[%147, %c0_72, %c0_73] : memref<8x2x8xf32, #tpu.memory_space<vmem>>, vector<1x2x8xf32>
    %149 = vector.shape_cast %148 : vector<1x2x8xf32> to vector<2x8xf32>
    %150 = vector.shape_cast %142 : vector<2x8xf32> to vector<1x2x8xf32>
    tpu.vector_store %arg11[%147, %c0_72, %c0_73], %150 {strides = array<i32>} : memref<8x2x8xf32, #tpu.memory_space<vmem>>, vector<1x2x8xf32>,
    %c2_i32 = arith.constant 2 : i32
    %c7_i32_74 = arith.constant 7 : i32
    %151 = arith.subi %c7_i32_74, %c2_i32 : i32
    %152 = arith.index_cast %c2_i32 : i32 to index
    %c0_75 = arith.constant 0 : index
    %c0_76 = arith.constant 0 : index
    %153 = vector.load %arg8[%152, %c0_75, %c0_76] : memref<8x2x32xf32, #tpu.memory_space<vmem>>, vector<1x2x32xf32>
    %154 = vector.shape_cast %153 : vector<1x2x32xf32> to vector<2x32xf32>
    %155 = arith.truncf %139 : vector<2x8xf32> to vector<2x8xbf16>
    %c0_77 = arith.constant 0 : index
    %c0_78 = arith.constant 0 : index
    %c0_79 = arith.constant 0 : index
    %156 = vector.load %arg5[%c0_77, %c0_78, %c0_79] : memref<2x8x32xbf16, #tpu.memory_space<vmem>>, vector<1x8x32xbf16>
    %157 = vector.shape_cast %156 : vector<1x8x32xbf16> to vector<8x32xbf16>
    %cst_80 = arith.constant dense<0.000000e+00> : vector<2x32xf32>
    %158 = tpu.matmul %155, %157, %cst_80 {dimension_numbers = #tpu.dot_dimension_numbers<[1], [0], [0], [1], [0, 0, 1, 1], [], []>} : vector<2x8xbf16>, vector<8x32xbf16>, vector<2x32xf32> -> vector<2x32xf32>
    %159 = arith.addf %154, %158 : vector<2x32xf32>
    %160 = arith.index_cast %151 : i32 to index
    %c0_81 = arith.constant 0 : index
    %c0_82 = arith.constant 0 : index
    %161 = vector.load %arg9[%160, %c0_81, %c0_82] : memref<8x2x32xf32, #tpu.memory_space<vmem>>, vector<1x2x32xf32>
    %162 = vector.shape_cast %161 : vector<1x2x32xf32> to vector<2x32xf32>
    %163 = arith.truncf %142 : vector<2x8xf32> to vector<2x8xbf16>
    %c1_83 = arith.constant 1 : index
    %c0_84 = arith.constant 0 : index
    %c0_85 = arith.constant 0 : index
    %164 = vector.load %arg5[%c1_83, %c0_84, %c0_85] : memref<2x8x32xbf16, #tpu.memory_space<vmem>>, vector<1x8x32xbf16>
    %165 = vector.shape_cast %164 : vector<1x8x32xbf16> to vector<8x32xbf16>
    %cst_86 = arith.constant dense<0.000000e+00> : vector<2x32xf32>
    %166 = tpu.matmul %163, %165, %cst_86 {dimension_numbers = #tpu.dot_dimension_numbers<[1], [0], [0], [1], [0, 0, 1, 1], [], []>} : vector<2x8xbf16>, vector<8x32xbf16>, vector<2x32xf32> -> vector<2x32xf32>
    %167 = arith.addf %162, %166 : vector<2x32xf32>
    %168 = vector.extract_strided_slice %159 {offsets = [0, 0], sizes = [2, 24], strides = [1, 1]} : vector<2x32xf32> to vector<2x24xf32>
    %169 = arith.negf %168 : vector<2x24xf32>
    %170 = math.exp %169 : vector<2x24xf32>
    %cst_87 = arith.constant 1.000000e+00 : f32
    %171 = vector.broadcast %cst_87 : f32 to vector<2x24xf32>
    %172 = arith.addf %171, %170 : vector<2x24xf32>
    %173 = arith.divf %171, %172 : vector<2x24xf32>
    %174 = vector.extract_strided_slice %167 {offsets = [0, 0], sizes = [2, 24], strides = [1, 1]} : vector<2x32xf32> to vector<2x24xf32>
    %175 = arith.negf %174 : vector<2x24xf32>
    %176 = math.exp %175 : vector<2x24xf32>
    %cst_88 = arith.constant 1.000000e+00 : f32
    %177 = vector.broadcast %cst_88 : f32 to vector<2x24xf32>
    %178 = arith.addf %177, %176 : vector<2x24xf32>
    %179 = arith.divf %177, %178 : vector<2x24xf32>
    %180 = vector.extract_strided_slice %159 {offsets = [0, 24], sizes = [2, 8], strides = [1, 1]} : vector<2x32xf32> to vector<2x8xf32>
    %181 = math.tanh %180 : vector<2x8xf32>
    %182 = vector.extract_strided_slice %167 {offsets = [0, 24], sizes = [2, 8], strides = [1, 1]} : vector<2x32xf32> to vector<2x8xf32>
    %183 = math.tanh %182 : vector<2x8xf32>
    %184 = vector.extract_strided_slice %173 {offsets = [0, 8], sizes = [2, 8], strides = [1, 1]} : vector<2x24xf32> to vector<2x8xf32>
    %185 = arith.mulf %184, %131 : vector<2x8xf32>
    %186 = vector.extract_strided_slice %173 {offsets = [0, 0], sizes = [2, 8], strides = [1, 1]} : vector<2x24xf32> to vector<2x8xf32>
    %187 = arith.mulf %186, %181 : vector<2x8xf32>
    %188 = arith.addf %185, %187 : vector<2x8xf32>
    %189 = vector.extract_strided_slice %179 {offsets = [0, 8], sizes = [2, 8], strides = [1, 1]} : vector<2x24xf32> to vector<2x8xf32>
    %190 = arith.mulf %189, %136 : vector<2x8xf32>
    %191 = vector.extract_strided_slice %179 {offsets = [0, 0], sizes = [2, 8], strides = [1, 1]} : vector<2x24xf32> to vector<2x8xf32>
    %192 = arith.mulf %191, %183 : vector<2x8xf32>
    %193 = arith.addf %190, %192 : vector<2x8xf32>
    %194 = vector.extract_strided_slice %173 {offsets = [0, 16], sizes = [2, 8], strides = [1, 1]} : vector<2x24xf32> to vector<2x8xf32>
    %195 = math.tanh %188 : vector<2x8xf32>
    %196 = arith.mulf %194, %195 : vector<2x8xf32>
    %197 = vector.extract_strided_slice %179 {offsets = [0, 16], sizes = [2, 8], strides = [1, 1]} : vector<2x24xf32> to vector<2x8xf32>
    %198 = math.tanh %193 : vector<2x8xf32>
    %199 = arith.mulf %197, %198 : vector<2x8xf32>
    %200 = arith.index_cast %c2_i32 : i32 to index
    %c0_89 = arith.constant 0 : index
    %c0_90 = arith.constant 0 : index
    %201 = vector.load %arg10[%200, %c0_89, %c0_90] : memref<8x2x8xf32, #tpu.memory_space<vmem>>, vector<1x2x8xf32>
    %202 = vector.shape_cast %201 : vector<1x2x8xf32> to vector<2x8xf32>
    %203 = vector.shape_cast %196 : vector<2x8xf32> to vector<1x2x8xf32>
    tpu.vector_store %arg10[%200, %c0_89, %c0_90], %203 {strides = array<i32>} : memref<8x2x8xf32, #tpu.memory_space<vmem>>, vector<1x2x8xf32>,
    %204 = arith.index_cast %151 : i32 to index
    %c0_91 = arith.constant 0 : index
    %c0_92 = arith.constant 0 : index
    %205 = vector.load %arg11[%204, %c0_91, %c0_92] : memref<8x2x8xf32, #tpu.memory_space<vmem>>, vector<1x2x8xf32>
    %206 = vector.shape_cast %205 : vector<1x2x8xf32> to vector<2x8xf32>
    %207 = vector.shape_cast %199 : vector<2x8xf32> to vector<1x2x8xf32>
    tpu.vector_store %arg11[%204, %c0_91, %c0_92], %207 {strides = array<i32>} : memref<8x2x8xf32, #tpu.memory_space<vmem>>, vector<1x2x8xf32>,
    %c3_i32 = arith.constant 3 : i32
    %c7_i32_93 = arith.constant 7 : i32
    %208 = arith.subi %c7_i32_93, %c3_i32 : i32
    %209 = arith.index_cast %c3_i32 : i32 to index
    %c0_94 = arith.constant 0 : index
    %c0_95 = arith.constant 0 : index
    %210 = vector.load %arg8[%209, %c0_94, %c0_95] : memref<8x2x32xf32, #tpu.memory_space<vmem>>, vector<1x2x32xf32>
    %211 = vector.shape_cast %210 : vector<1x2x32xf32> to vector<2x32xf32>
    %212 = arith.truncf %196 : vector<2x8xf32> to vector<2x8xbf16>
    %c0_96 = arith.constant 0 : index
    %c0_97 = arith.constant 0 : index
    %c0_98 = arith.constant 0 : index
    %213 = vector.load %arg5[%c0_96, %c0_97, %c0_98] : memref<2x8x32xbf16, #tpu.memory_space<vmem>>, vector<1x8x32xbf16>
    %214 = vector.shape_cast %213 : vector<1x8x32xbf16> to vector<8x32xbf16>
    %cst_99 = arith.constant dense<0.000000e+00> : vector<2x32xf32>
    %215 = tpu.matmul %212, %214, %cst_99 {dimension_numbers = #tpu.dot_dimension_numbers<[1], [0], [0], [1], [0, 0, 1, 1], [], []>} : vector<2x8xbf16>, vector<8x32xbf16>, vector<2x32xf32> -> vector<2x32xf32>
    %216 = arith.addf %211, %215 : vector<2x32xf32>
    %217 = arith.index_cast %208 : i32 to index
    %c0_100 = arith.constant 0 : index
    %c0_101 = arith.constant 0 : index
    %218 = vector.load %arg9[%217, %c0_100, %c0_101] : memref<8x2x32xf32, #tpu.memory_space<vmem>>, vector<1x2x32xf32>
    %219 = vector.shape_cast %218 : vector<1x2x32xf32> to vector<2x32xf32>
    %220 = arith.truncf %199 : vector<2x8xf32> to vector<2x8xbf16>
    %c1_102 = arith.constant 1 : index
    %c0_103 = arith.constant 0 : index
    %c0_104 = arith.constant 0 : index
    %221 = vector.load %arg5[%c1_102, %c0_103, %c0_104] : memref<2x8x32xbf16, #tpu.memory_space<vmem>>, vector<1x8x32xbf16>
    %222 = vector.shape_cast %221 : vector<1x8x32xbf16> to vector<8x32xbf16>
    %cst_105 = arith.constant dense<0.000000e+00> : vector<2x32xf32>
    %223 = tpu.matmul %220, %222, %cst_105 {dimension_numbers = #tpu.dot_dimension_numbers<[1], [0], [0], [1], [0, 0, 1, 1], [], []>} : vector<2x8xbf16>, vector<8x32xbf16>, vector<2x32xf32> -> vector<2x32xf32>
    %224 = arith.addf %219, %223 : vector<2x32xf32>
    %225 = vector.extract_strided_slice %216 {offsets = [0, 0], sizes = [2, 24], strides = [1, 1]} : vector<2x32xf32> to vector<2x24xf32>
    %226 = arith.negf %225 : vector<2x24xf32>
    %227 = math.exp %226 : vector<2x24xf32>
    %cst_106 = arith.constant 1.000000e+00 : f32
    %228 = vector.broadcast %cst_106 : f32 to vector<2x24xf32>
    %229 = arith.addf %228, %227 : vector<2x24xf32>
    %230 = arith.divf %228, %229 : vector<2x24xf32>
    %231 = vector.extract_strided_slice %224 {offsets = [0, 0], sizes = [2, 24], strides = [1, 1]} : vector<2x32xf32> to vector<2x24xf32>
    %232 = arith.negf %231 : vector<2x24xf32>
    %233 = math.exp %232 : vector<2x24xf32>
    %cst_107 = arith.constant 1.000000e+00 : f32
    %234 = vector.broadcast %cst_107 : f32 to vector<2x24xf32>
    %235 = arith.addf %234, %233 : vector<2x24xf32>
    %236 = arith.divf %234, %235 : vector<2x24xf32>
    %237 = vector.extract_strided_slice %216 {offsets = [0, 24], sizes = [2, 8], strides = [1, 1]} : vector<2x32xf32> to vector<2x8xf32>
    %238 = math.tanh %237 : vector<2x8xf32>
    %239 = vector.extract_strided_slice %224 {offsets = [0, 24], sizes = [2, 8], strides = [1, 1]} : vector<2x32xf32> to vector<2x8xf32>
    %240 = math.tanh %239 : vector<2x8xf32>
    %241 = vector.extract_strided_slice %230 {offsets = [0, 8], sizes = [2, 8], strides = [1, 1]} : vector<2x24xf32> to vector<2x8xf32>
    %242 = arith.mulf %241, %188 : vector<2x8xf32>
    %243 = vector.extract_strided_slice %230 {offsets = [0, 0], sizes = [2, 8], strides = [1, 1]} : vector<2x24xf32> to vector<2x8xf32>
    %244 = arith.mulf %243, %238 : vector<2x8xf32>
    %245 = arith.addf %242, %244 : vector<2x8xf32>
    %246 = vector.extract_strided_slice %236 {offsets = [0, 8], sizes = [2, 8], strides = [1, 1]} : vector<2x24xf32> to vector<2x8xf32>
    %247 = arith.mulf %246, %193 : vector<2x8xf32>
    %248 = vector.extract_strided_slice %236 {offsets = [0, 0], sizes = [2, 8], strides = [1, 1]} : vector<2x24xf32> to vector<2x8xf32>
    %249 = arith.mulf %248, %240 : vector<2x8xf32>
    %250 = arith.addf %247, %249 : vector<2x8xf32>
    %251 = vector.extract_strided_slice %230 {offsets = [0, 16], sizes = [2, 8], strides = [1, 1]} : vector<2x24xf32> to vector<2x8xf32>
    %252 = math.tanh %245 : vector<2x8xf32>
    %253 = arith.mulf %251, %252 : vector<2x8xf32>
    %254 = vector.extract_strided_slice %236 {offsets = [0, 16], sizes = [2, 8], strides = [1, 1]} : vector<2x24xf32> to vector<2x8xf32>
    %255 = math.tanh %250 : vector<2x8xf32>
    %256 = arith.mulf %254, %255 : vector<2x8xf32>
    %257 = arith.index_cast %c3_i32 : i32 to index
    %c0_108 = arith.constant 0 : index
    %c0_109 = arith.constant 0 : index
    %258 = vector.load %arg10[%257, %c0_108, %c0_109] : memref<8x2x8xf32, #tpu.memory_space<vmem>>, vector<1x2x8xf32>
    %259 = vector.shape_cast %258 : vector<1x2x8xf32> to vector<2x8xf32>
    %260 = vector.shape_cast %253 : vector<2x8xf32> to vector<1x2x8xf32>
    tpu.vector_store %arg10[%257, %c0_108, %c0_109], %260 {strides = array<i32>} : memref<8x2x8xf32, #tpu.memory_space<vmem>>, vector<1x2x8xf32>,
    %261 = arith.index_cast %208 : i32 to index
    %c0_110 = arith.constant 0 : index
    %c0_111 = arith.constant 0 : index
    %262 = vector.load %arg11[%261, %c0_110, %c0_111] : memref<8x2x8xf32, #tpu.memory_space<vmem>>, vector<1x2x8xf32>
    %263 = vector.shape_cast %262 : vector<1x2x8xf32> to vector<2x8xf32>
    %264 = vector.shape_cast %256 : vector<2x8xf32> to vector<1x2x8xf32>
    tpu.vector_store %arg11[%261, %c0_110, %c0_111], %264 {strides = array<i32>} : memref<8x2x8xf32, #tpu.memory_space<vmem>>, vector<1x2x8xf32>,
    %c4_i32 = arith.constant 4 : i32
    %c7_i32_112 = arith.constant 7 : i32
    %265 = arith.subi %c7_i32_112, %c4_i32 : i32
    %266 = arith.index_cast %c4_i32 : i32 to index
    %c0_113 = arith.constant 0 : index
    %c0_114 = arith.constant 0 : index
    %267 = vector.load %arg8[%266, %c0_113, %c0_114] : memref<8x2x32xf32, #tpu.memory_space<vmem>>, vector<1x2x32xf32>
    %268 = vector.shape_cast %267 : vector<1x2x32xf32> to vector<2x32xf32>
    %269 = arith.truncf %253 : vector<2x8xf32> to vector<2x8xbf16>
    %c0_115 = arith.constant 0 : index
    %c0_116 = arith.constant 0 : index
    %c0_117 = arith.constant 0 : index
    %270 = vector.load %arg5[%c0_115, %c0_116, %c0_117] : memref<2x8x32xbf16, #tpu.memory_space<vmem>>, vector<1x8x32xbf16>
    %271 = vector.shape_cast %270 : vector<1x8x32xbf16> to vector<8x32xbf16>
    %cst_118 = arith.constant dense<0.000000e+00> : vector<2x32xf32>
    %272 = tpu.matmul %269, %271, %cst_118 {dimension_numbers = #tpu.dot_dimension_numbers<[1], [0], [0], [1], [0, 0, 1, 1], [], []>} : vector<2x8xbf16>, vector<8x32xbf16>, vector<2x32xf32> -> vector<2x32xf32>
    %273 = arith.addf %268, %272 : vector<2x32xf32>
    %274 = arith.index_cast %265 : i32 to index
    %c0_119 = arith.constant 0 : index
    %c0_120 = arith.constant 0 : index
    %275 = vector.load %arg9[%274, %c0_119, %c0_120] : memref<8x2x32xf32, #tpu.memory_space<vmem>>, vector<1x2x32xf32>
    %276 = vector.shape_cast %275 : vector<1x2x32xf32> to vector<2x32xf32>
    %277 = arith.truncf %256 : vector<2x8xf32> to vector<2x8xbf16>
    %c1_121 = arith.constant 1 : index
    %c0_122 = arith.constant 0 : index
    %c0_123 = arith.constant 0 : index
    %278 = vector.load %arg5[%c1_121, %c0_122, %c0_123] : memref<2x8x32xbf16, #tpu.memory_space<vmem>>, vector<1x8x32xbf16>
    %279 = vector.shape_cast %278 : vector<1x8x32xbf16> to vector<8x32xbf16>
    %cst_124 = arith.constant dense<0.000000e+00> : vector<2x32xf32>
    %280 = tpu.matmul %277, %279, %cst_124 {dimension_numbers = #tpu.dot_dimension_numbers<[1], [0], [0], [1], [0, 0, 1, 1], [], []>} : vector<2x8xbf16>, vector<8x32xbf16>, vector<2x32xf32> -> vector<2x32xf32>
    %281 = arith.addf %276, %280 : vector<2x32xf32>
    %282 = vector.extract_strided_slice %273 {offsets = [0, 0], sizes = [2, 24], strides = [1, 1]} : vector<2x32xf32> to vector<2x24xf32>
    %283 = arith.negf %282 : vector<2x24xf32>
    %284 = math.exp %283 : vector<2x24xf32>
    %cst_125 = arith.constant 1.000000e+00 : f32
    %285 = vector.broadcast %cst_125 : f32 to vector<2x24xf32>
    %286 = arith.addf %285, %284 : vector<2x24xf32>
    %287 = arith.divf %285, %286 : vector<2x24xf32>
    %288 = vector.extract_strided_slice %281 {offsets = [0, 0], sizes = [2, 24], strides = [1, 1]} : vector<2x32xf32> to vector<2x24xf32>
    %289 = arith.negf %288 : vector<2x24xf32>
    %290 = math.exp %289 : vector<2x24xf32>
    %cst_126 = arith.constant 1.000000e+00 : f32
    %291 = vector.broadcast %cst_126 : f32 to vector<2x24xf32>
    %292 = arith.addf %291, %290 : vector<2x24xf32>
    %293 = arith.divf %291, %292 : vector<2x24xf32>
    %294 = vector.extract_strided_slice %273 {offsets = [0, 24], sizes = [2, 8], strides = [1, 1]} : vector<2x32xf32> to vector<2x8xf32>
    %295 = math.tanh %294 : vector<2x8xf32>
    %296 = vector.extract_strided_slice %281 {offsets = [0, 24], sizes = [2, 8], strides = [1, 1]} : vector<2x32xf32> to vector<2x8xf32>
    %297 = math.tanh %296 : vector<2x8xf32>
    %298 = vector.extract_strided_slice %287 {offsets = [0, 8], sizes = [2, 8], strides = [1, 1]} : vector<2x24xf32> to vector<2x8xf32>
    %299 = arith.mulf %298, %245 : vector<2x8xf32>
    %300 = vector.extract_strided_slice %287 {offsets = [0, 0], sizes = [2, 8], strides = [1, 1]} : vector<2x24xf32> to vector<2x8xf32>
    %301 = arith.mulf %300, %295 : vector<2x8xf32>
    %302 = arith.addf %299, %301 : vector<2x8xf32>
    %303 = vector.extract_strided_slice %293 {offsets = [0, 8], sizes = [2, 8], strides = [1, 1]} : vector<2x24xf32> to vector<2x8xf32>
    %304 = arith.mulf %303, %250 : vector<2x8xf32>
    %305 = vector.extract_strided_slice %293 {offsets = [0, 0], sizes = [2, 8], strides = [1, 1]} : vector<2x24xf32> to vector<2x8xf32>
    %306 = arith.mulf %305, %297 : vector<2x8xf32>
    %307 = arith.addf %304, %306 : vector<2x8xf32>
    %308 = vector.extract_strided_slice %287 {offsets = [0, 16], sizes = [2, 8], strides = [1, 1]} : vector<2x24xf32> to vector<2x8xf32>
    %309 = math.tanh %302 : vector<2x8xf32>
    %310 = arith.mulf %308, %309 : vector<2x8xf32>
    %311 = vector.extract_strided_slice %293 {offsets = [0, 16], sizes = [2, 8], strides = [1, 1]} : vector<2x24xf32> to vector<2x8xf32>
    %312 = math.tanh %307 : vector<2x8xf32>
    %313 = arith.mulf %311, %312 : vector<2x8xf32>
    %314 = arith.index_cast %c4_i32 : i32 to index
    %c0_127 = arith.constant 0 : index
    %c0_128 = arith.constant 0 : index
    %315 = vector.load %arg10[%314, %c0_127, %c0_128] : memref<8x2x8xf32, #tpu.memory_space<vmem>>, vector<1x2x8xf32>
    %316 = vector.shape_cast %315 : vector<1x2x8xf32> to vector<2x8xf32>
    %317 = vector.shape_cast %310 : vector<2x8xf32> to vector<1x2x8xf32>
    tpu.vector_store %arg10[%314, %c0_127, %c0_128], %317 {strides = array<i32>} : memref<8x2x8xf32, #tpu.memory_space<vmem>>, vector<1x2x8xf32>,
    %318 = arith.index_cast %265 : i32 to index
    %c0_129 = arith.constant 0 : index
    %c0_130 = arith.constant 0 : index
    %319 = vector.load %arg11[%318, %c0_129, %c0_130] : memref<8x2x8xf32, #tpu.memory_space<vmem>>, vector<1x2x8xf32>
    %320 = vector.shape_cast %319 : vector<1x2x8xf32> to vector<2x8xf32>
    %321 = vector.shape_cast %313 : vector<2x8xf32> to vector<1x2x8xf32>
    tpu.vector_store %arg11[%318, %c0_129, %c0_130], %321 {strides = array<i32>} : memref<8x2x8xf32, #tpu.memory_space<vmem>>, vector<1x2x8xf32>,
    %c5_i32 = arith.constant 5 : i32
    %c7_i32_131 = arith.constant 7 : i32
    %322 = arith.subi %c7_i32_131, %c5_i32 : i32
    %323 = arith.index_cast %c5_i32 : i32 to index
    %c0_132 = arith.constant 0 : index
    %c0_133 = arith.constant 0 : index
    %324 = vector.load %arg8[%323, %c0_132, %c0_133] : memref<8x2x32xf32, #tpu.memory_space<vmem>>, vector<1x2x32xf32>
    %325 = vector.shape_cast %324 : vector<1x2x32xf32> to vector<2x32xf32>
    %326 = arith.truncf %310 : vector<2x8xf32> to vector<2x8xbf16>
    %c0_134 = arith.constant 0 : index
    %c0_135 = arith.constant 0 : index
    %c0_136 = arith.constant 0 : index
    %327 = vector.load %arg5[%c0_134, %c0_135, %c0_136] : memref<2x8x32xbf16, #tpu.memory_space<vmem>>, vector<1x8x32xbf16>
    %328 = vector.shape_cast %327 : vector<1x8x32xbf16> to vector<8x32xbf16>
    %cst_137 = arith.constant dense<0.000000e+00> : vector<2x32xf32>
    %329 = tpu.matmul %326, %328, %cst_137 {dimension_numbers = #tpu.dot_dimension_numbers<[1], [0], [0], [1], [0, 0, 1, 1], [], []>} : vector<2x8xbf16>, vector<8x32xbf16>, vector<2x32xf32> -> vector<2x32xf32>
    %330 = arith.addf %325, %329 : vector<2x32xf32>
    %331 = arith.index_cast %322 : i32 to index
    %c0_138 = arith.constant 0 : index
    %c0_139 = arith.constant 0 : index
    %332 = vector.load %arg9[%331, %c0_138, %c0_139] : memref<8x2x32xf32, #tpu.memory_space<vmem>>, vector<1x2x32xf32>
    %333 = vector.shape_cast %332 : vector<1x2x32xf32> to vector<2x32xf32>
    %334 = arith.truncf %313 : vector<2x8xf32> to vector<2x8xbf16>
    %c1_140 = arith.constant 1 : index
    %c0_141 = arith.constant 0 : index
    %c0_142 = arith.constant 0 : index
    %335 = vector.load %arg5[%c1_140, %c0_141, %c0_142] : memref<2x8x32xbf16, #tpu.memory_space<vmem>>, vector<1x8x32xbf16>
    %336 = vector.shape_cast %335 : vector<1x8x32xbf16> to vector<8x32xbf16>
    %cst_143 = arith.constant dense<0.000000e+00> : vector<2x32xf32>
    %337 = tpu.matmul %334, %336, %cst_143 {dimension_numbers = #tpu.dot_dimension_numbers<[1], [0], [0], [1], [0, 0, 1, 1], [], []>} : vector<2x8xbf16>, vector<8x32xbf16>, vector<2x32xf32> -> vector<2x32xf32>
    %338 = arith.addf %333, %337 : vector<2x32xf32>
    %339 = vector.extract_strided_slice %330 {offsets = [0, 0], sizes = [2, 24], strides = [1, 1]} : vector<2x32xf32> to vector<2x24xf32>
    %340 = arith.negf %339 : vector<2x24xf32>
    %341 = math.exp %340 : vector<2x24xf32>
    %cst_144 = arith.constant 1.000000e+00 : f32
    %342 = vector.broadcast %cst_144 : f32 to vector<2x24xf32>
    %343 = arith.addf %342, %341 : vector<2x24xf32>
    %344 = arith.divf %342, %343 : vector<2x24xf32>
    %345 = vector.extract_strided_slice %338 {offsets = [0, 0], sizes = [2, 24], strides = [1, 1]} : vector<2x32xf32> to vector<2x24xf32>
    %346 = arith.negf %345 : vector<2x24xf32>
    %347 = math.exp %346 : vector<2x24xf32>
    %cst_145 = arith.constant 1.000000e+00 : f32
    %348 = vector.broadcast %cst_145 : f32 to vector<2x24xf32>
    %349 = arith.addf %348, %347 : vector<2x24xf32>
    %350 = arith.divf %348, %349 : vector<2x24xf32>
    %351 = vector.extract_strided_slice %330 {offsets = [0, 24], sizes = [2, 8], strides = [1, 1]} : vector<2x32xf32> to vector<2x8xf32>
    %352 = math.tanh %351 : vector<2x8xf32>
    %353 = vector.extract_strided_slice %338 {offsets = [0, 24], sizes = [2, 8], strides = [1, 1]} : vector<2x32xf32> to vector<2x8xf32>
    %354 = math.tanh %353 : vector<2x8xf32>
    %355 = vector.extract_strided_slice %344 {offsets = [0, 8], sizes = [2, 8], strides = [1, 1]} : vector<2x24xf32> to vector<2x8xf32>
    %356 = arith.mulf %355, %302 : vector<2x8xf32>
    %357 = vector.extract_strided_slice %344 {offsets = [0, 0], sizes = [2, 8], strides = [1, 1]} : vector<2x24xf32> to vector<2x8xf32>
    %358 = arith.mulf %357, %352 : vector<2x8xf32>
    %359 = arith.addf %356, %358 : vector<2x8xf32>
    %360 = vector.extract_strided_slice %350 {offsets = [0, 8], sizes = [2, 8], strides = [1, 1]} : vector<2x24xf32> to vector<2x8xf32>
    %361 = arith.mulf %360, %307 : vector<2x8xf32>
    %362 = vector.extract_strided_slice %350 {offsets = [0, 0], sizes = [2, 8], strides = [1, 1]} : vector<2x24xf32> to vector<2x8xf32>
    %363 = arith.mulf %362, %354 : vector<2x8xf32>
    %364 = arith.addf %361, %363 : vector<2x8xf32>
    %365 = vector.extract_strided_slice %344 {offsets = [0, 16], sizes = [2, 8], strides = [1, 1]} : vector<2x24xf32> to vector<2x8xf32>
    %366 = math.tanh %359 : vector<2x8xf32>
    %367 = arith.mulf %365, %366 : vector<2x8xf32>
    %368 = vector.extract_strided_slice %350 {offsets = [0, 16], sizes = [2, 8], strides = [1, 1]} : vector<2x24xf32> to vector<2x8xf32>
    %369 = math.tanh %364 : vector<2x8xf32>
    %370 = arith.mulf %368, %369 : vector<2x8xf32>
    %371 = arith.index_cast %c5_i32 : i32 to index
    %c0_146 = arith.constant 0 : index
    %c0_147 = arith.constant 0 : index
    %372 = vector.load %arg10[%371, %c0_146, %c0_147] : memref<8x2x8xf32, #tpu.memory_space<vmem>>, vector<1x2x8xf32>
    %373 = vector.shape_cast %372 : vector<1x2x8xf32> to vector<2x8xf32>
    %374 = vector.shape_cast %367 : vector<2x8xf32> to vector<1x2x8xf32>
    tpu.vector_store %arg10[%371, %c0_146, %c0_147], %374 {strides = array<i32>} : memref<8x2x8xf32, #tpu.memory_space<vmem>>, vector<1x2x8xf32>,
    %375 = arith.index_cast %322 : i32 to index
    %c0_148 = arith.constant 0 : index
    %c0_149 = arith.constant 0 : index
    %376 = vector.load %arg11[%375, %c0_148, %c0_149] : memref<8x2x8xf32, #tpu.memory_space<vmem>>, vector<1x2x8xf32>
    %377 = vector.shape_cast %376 : vector<1x2x8xf32> to vector<2x8xf32>
    %378 = vector.shape_cast %370 : vector<2x8xf32> to vector<1x2x8xf32>
    tpu.vector_store %arg11[%375, %c0_148, %c0_149], %378 {strides = array<i32>} : memref<8x2x8xf32, #tpu.memory_space<vmem>>, vector<1x2x8xf32>,
    %c6_i32 = arith.constant 6 : i32
    %c7_i32_150 = arith.constant 7 : i32
    %379 = arith.subi %c7_i32_150, %c6_i32 : i32
    %380 = arith.index_cast %c6_i32 : i32 to index
    %c0_151 = arith.constant 0 : index
    %c0_152 = arith.constant 0 : index
    %381 = vector.load %arg8[%380, %c0_151, %c0_152] : memref<8x2x32xf32, #tpu.memory_space<vmem>>, vector<1x2x32xf32>
    %382 = vector.shape_cast %381 : vector<1x2x32xf32> to vector<2x32xf32>
    %383 = arith.truncf %367 : vector<2x8xf32> to vector<2x8xbf16>
    %c0_153 = arith.constant 0 : index
    %c0_154 = arith.constant 0 : index
    %c0_155 = arith.constant 0 : index
    %384 = vector.load %arg5[%c0_153, %c0_154, %c0_155] : memref<2x8x32xbf16, #tpu.memory_space<vmem>>, vector<1x8x32xbf16>
    %385 = vector.shape_cast %384 : vector<1x8x32xbf16> to vector<8x32xbf16>
    %cst_156 = arith.constant dense<0.000000e+00> : vector<2x32xf32>
    %386 = tpu.matmul %383, %385, %cst_156 {dimension_numbers = #tpu.dot_dimension_numbers<[1], [0], [0], [1], [0, 0, 1, 1], [], []>} : vector<2x8xbf16>, vector<8x32xbf16>, vector<2x32xf32> -> vector<2x32xf32>
    %387 = arith.addf %382, %386 : vector<2x32xf32>
    %388 = arith.index_cast %379 : i32 to index
    %c0_157 = arith.constant 0 : index
    %c0_158 = arith.constant 0 : index
    %389 = vector.load %arg9[%388, %c0_157, %c0_158] : memref<8x2x32xf32, #tpu.memory_space<vmem>>, vector<1x2x32xf32>
    %390 = vector.shape_cast %389 : vector<1x2x32xf32> to vector<2x32xf32>
    %391 = arith.truncf %370 : vector<2x8xf32> to vector<2x8xbf16>
    %c1_159 = arith.constant 1 : index
    %c0_160 = arith.constant 0 : index
    %c0_161 = arith.constant 0 : index
    %392 = vector.load %arg5[%c1_159, %c0_160, %c0_161] : memref<2x8x32xbf16, #tpu.memory_space<vmem>>, vector<1x8x32xbf16>
    %393 = vector.shape_cast %392 : vector<1x8x32xbf16> to vector<8x32xbf16>
    %cst_162 = arith.constant dense<0.000000e+00> : vector<2x32xf32>
    %394 = tpu.matmul %391, %393, %cst_162 {dimension_numbers = #tpu.dot_dimension_numbers<[1], [0], [0], [1], [0, 0, 1, 1], [], []>} : vector<2x8xbf16>, vector<8x32xbf16>, vector<2x32xf32> -> vector<2x32xf32>
    %395 = arith.addf %390, %394 : vector<2x32xf32>
    %396 = vector.extract_strided_slice %387 {offsets = [0, 0], sizes = [2, 24], strides = [1, 1]} : vector<2x32xf32> to vector<2x24xf32>
    %397 = arith.negf %396 : vector<2x24xf32>
    %398 = math.exp %397 : vector<2x24xf32>
    %cst_163 = arith.constant 1.000000e+00 : f32
    %399 = vector.broadcast %cst_163 : f32 to vector<2x24xf32>
    %400 = arith.addf %399, %398 : vector<2x24xf32>
    %401 = arith.divf %399, %400 : vector<2x24xf32>
    %402 = vector.extract_strided_slice %395 {offsets = [0, 0], sizes = [2, 24], strides = [1, 1]} : vector<2x32xf32> to vector<2x24xf32>
    %403 = arith.negf %402 : vector<2x24xf32>
    %404 = math.exp %403 : vector<2x24xf32>
    %cst_164 = arith.constant 1.000000e+00 : f32
    %405 = vector.broadcast %cst_164 : f32 to vector<2x24xf32>
    %406 = arith.addf %405, %404 : vector<2x24xf32>
    %407 = arith.divf %405, %406 : vector<2x24xf32>
    %408 = vector.extract_strided_slice %387 {offsets = [0, 24], sizes = [2, 8], strides = [1, 1]} : vector<2x32xf32> to vector<2x8xf32>
    %409 = math.tanh %408 : vector<2x8xf32>
    %410 = vector.extract_strided_slice %395 {offsets = [0, 24], sizes = [2, 8], strides = [1, 1]} : vector<2x32xf32> to vector<2x8xf32>
    %411 = math.tanh %410 : vector<2x8xf32>
    %412 = vector.extract_strided_slice %401 {offsets = [0, 8], sizes = [2, 8], strides = [1, 1]} : vector<2x24xf32> to vector<2x8xf32>
    %413 = arith.mulf %412, %359 : vector<2x8xf32>
    %414 = vector.extract_strided_slice %401 {offsets = [0, 0], sizes = [2, 8], strides = [1, 1]} : vector<2x24xf32> to vector<2x8xf32>
    %415 = arith.mulf %414, %409 : vector<2x8xf32>
    %416 = arith.addf %413, %415 : vector<2x8xf32>
    %417 = vector.extract_strided_slice %407 {offsets = [0, 8], sizes = [2, 8], strides = [1, 1]} : vector<2x24xf32> to vector<2x8xf32>
    %418 = arith.mulf %417, %364 : vector<2x8xf32>
    %419 = vector.extract_strided_slice %407 {offsets = [0, 0], sizes = [2, 8], strides = [1, 1]} : vector<2x24xf32> to vector<2x8xf32>
    %420 = arith.mulf %419, %411 : vector<2x8xf32>
    %421 = arith.addf %418, %420 : vector<2x8xf32>
    %422 = vector.extract_strided_slice %401 {offsets = [0, 16], sizes = [2, 8], strides = [1, 1]} : vector<2x24xf32> to vector<2x8xf32>
    %423 = math.tanh %416 : vector<2x8xf32>
    %424 = arith.mulf %422, %423 : vector<2x8xf32>
    %425 = vector.extract_strided_slice %407 {offsets = [0, 16], sizes = [2, 8], strides = [1, 1]} : vector<2x24xf32> to vector<2x8xf32>
    %426 = math.tanh %421 : vector<2x8xf32>
    %427 = arith.mulf %425, %426 : vector<2x8xf32>
    %428 = arith.index_cast %c6_i32 : i32 to index
    %c0_165 = arith.constant 0 : index
    %c0_166 = arith.constant 0 : index
    %429 = vector.load %arg10[%428, %c0_165, %c0_166] : memref<8x2x8xf32, #tpu.memory_space<vmem>>, vector<1x2x8xf32>
    %430 = vector.shape_cast %429 : vector<1x2x8xf32> to vector<2x8xf32>
    %431 = vector.shape_cast %424 : vector<2x8xf32> to vector<1x2x8xf32>
    tpu.vector_store %arg10[%428, %c0_165, %c0_166], %431 {strides = array<i32>} : memref<8x2x8xf32, #tpu.memory_space<vmem>>, vector<1x2x8xf32>,
    %432 = arith.index_cast %379 : i32 to index
    %c0_167 = arith.constant 0 : index
    %c0_168 = arith.constant 0 : index
    %433 = vector.load %arg11[%432, %c0_167, %c0_168] : memref<8x2x8xf32, #tpu.memory_space<vmem>>, vector<1x2x8xf32>
    %434 = vector.shape_cast %433 : vector<1x2x8xf32> to vector<2x8xf32>
    %435 = vector.shape_cast %427 : vector<2x8xf32> to vector<1x2x8xf32>
    tpu.vector_store %arg11[%432, %c0_167, %c0_168], %435 {strides = array<i32>} : memref<8x2x8xf32, #tpu.memory_space<vmem>>, vector<1x2x8xf32>,
    %c7_i32_169 = arith.constant 7 : i32
    %c7_i32_170 = arith.constant 7 : i32
    %436 = arith.subi %c7_i32_170, %c7_i32_169 : i32
    %437 = arith.index_cast %c7_i32_169 : i32 to index
    %c0_171 = arith.constant 0 : index
    %c0_172 = arith.constant 0 : index
    %438 = vector.load %arg8[%437, %c0_171, %c0_172] : memref<8x2x32xf32, #tpu.memory_space<vmem>>, vector<1x2x32xf32>
    %439 = vector.shape_cast %438 : vector<1x2x32xf32> to vector<2x32xf32>
    %440 = arith.truncf %424 : vector<2x8xf32> to vector<2x8xbf16>
    %c0_173 = arith.constant 0 : index
    %c0_174 = arith.constant 0 : index
    %c0_175 = arith.constant 0 : index
    %441 = vector.load %arg5[%c0_173, %c0_174, %c0_175] : memref<2x8x32xbf16, #tpu.memory_space<vmem>>, vector<1x8x32xbf16>
    %442 = vector.shape_cast %441 : vector<1x8x32xbf16> to vector<8x32xbf16>
    %cst_176 = arith.constant dense<0.000000e+00> : vector<2x32xf32>
    %443 = tpu.matmul %440, %442, %cst_176 {dimension_numbers = #tpu.dot_dimension_numbers<[1], [0], [0], [1], [0, 0, 1, 1], [], []>} : vector<2x8xbf16>, vector<8x32xbf16>, vector<2x32xf32> -> vector<2x32xf32>
    %444 = arith.addf %439, %443 : vector<2x32xf32>
    %445 = arith.index_cast %436 : i32 to index
    %c0_177 = arith.constant 0 : index
    %c0_178 = arith.constant 0 : index
    %446 = vector.load %arg9[%445, %c0_177, %c0_178] : memref<8x2x32xf32, #tpu.memory_space<vmem>>, vector<1x2x32xf32>
    %447 = vector.shape_cast %446 : vector<1x2x32xf32> to vector<2x32xf32>
    %448 = arith.truncf %427 : vector<2x8xf32> to vector<2x8xbf16>
    %c1_179 = arith.constant 1 : index
    %c0_180 = arith.constant 0 : index
    %c0_181 = arith.constant 0 : index
    %449 = vector.load %arg5[%c1_179, %c0_180, %c0_181] : memref<2x8x32xbf16, #tpu.memory_space<vmem>>, vector<1x8x32xbf16>
    %450 = vector.shape_cast %449 : vector<1x8x32xbf16> to vector<8x32xbf16>
    %cst_182 = arith.constant dense<0.000000e+00> : vector<2x32xf32>
    %451 = tpu.matmul %448, %450, %cst_182 {dimension_numbers = #tpu.dot_dimension_numbers<[1], [0], [0], [1], [0, 0, 1, 1], [], []>} : vector<2x8xbf16>, vector<8x32xbf16>, vector<2x32xf32> -> vector<2x32xf32>
    %452 = arith.addf %447, %451 : vector<2x32xf32>
    %453 = vector.extract_strided_slice %444 {offsets = [0, 0], sizes = [2, 24], strides = [1, 1]} : vector<2x32xf32> to vector<2x24xf32>
    %454 = arith.negf %453 : vector<2x24xf32>
    %455 = math.exp %454 : vector<2x24xf32>
    %cst_183 = arith.constant 1.000000e+00 : f32
    %456 = vector.broadcast %cst_183 : f32 to vector<2x24xf32>
    %457 = arith.addf %456, %455 : vector<2x24xf32>
    %458 = arith.divf %456, %457 : vector<2x24xf32>
    %459 = vector.extract_strided_slice %452 {offsets = [0, 0], sizes = [2, 24], strides = [1, 1]} : vector<2x32xf32> to vector<2x24xf32>
    %460 = arith.negf %459 : vector<2x24xf32>
    %461 = math.exp %460 : vector<2x24xf32>
    %cst_184 = arith.constant 1.000000e+00 : f32
    %462 = vector.broadcast %cst_184 : f32 to vector<2x24xf32>
    %463 = arith.addf %462, %461 : vector<2x24xf32>
    %464 = arith.divf %462, %463 : vector<2x24xf32>
    %465 = vector.extract_strided_slice %444 {offsets = [0, 24], sizes = [2, 8], strides = [1, 1]} : vector<2x32xf32> to vector<2x8xf32>
    %466 = math.tanh %465 : vector<2x8xf32>
    %467 = vector.extract_strided_slice %452 {offsets = [0, 24], sizes = [2, 8], strides = [1, 1]} : vector<2x32xf32> to vector<2x8xf32>
    %468 = math.tanh %467 : vector<2x8xf32>
    %469 = vector.extract_strided_slice %458 {offsets = [0, 8], sizes = [2, 8], strides = [1, 1]} : vector<2x24xf32> to vector<2x8xf32>
    %470 = arith.mulf %469, %416 : vector<2x8xf32>
    %471 = vector.extract_strided_slice %458 {offsets = [0, 0], sizes = [2, 8], strides = [1, 1]} : vector<2x24xf32> to vector<2x8xf32>
    %472 = arith.mulf %471, %466 : vector<2x8xf32>
    %473 = arith.addf %470, %472 : vector<2x8xf32>
    %474 = vector.extract_strided_slice %464 {offsets = [0, 8], sizes = [2, 8], strides = [1, 1]} : vector<2x24xf32> to vector<2x8xf32>
    %475 = arith.mulf %474, %421 : vector<2x8xf32>
    %476 = vector.extract_strided_slice %464 {offsets = [0, 0], sizes = [2, 8], strides = [1, 1]} : vector<2x24xf32> to vector<2x8xf32>
    %477 = arith.mulf %476, %468 : vector<2x8xf32>
    %478 = arith.addf %475, %477 : vector<2x8xf32>
    %479 = vector.extract_strided_slice %458 {offsets = [0, 16], sizes = [2, 8], strides = [1, 1]} : vector<2x24xf32> to vector<2x8xf32>
    %480 = math.tanh %473 : vector<2x8xf32>
    %481 = arith.mulf %479, %480 : vector<2x8xf32>
    %482 = vector.extract_strided_slice %464 {offsets = [0, 16], sizes = [2, 8], strides = [1, 1]} : vector<2x24xf32> to vector<2x8xf32>
    %483 = math.tanh %478 : vector<2x8xf32>
    %484 = arith.mulf %482, %483 : vector<2x8xf32>
    %485 = arith.index_cast %c7_i32_169 : i32 to index
    %c0_185 = arith.constant 0 : index
    %c0_186 = arith.constant 0 : index
    %486 = vector.load %arg10[%485, %c0_185, %c0_186] : memref<8x2x8xf32, #tpu.memory_space<vmem>>, vector<1x2x8xf32>
    %487 = vector.shape_cast %486 : vector<1x2x8xf32> to vector<2x8xf32>
    %488 = vector.shape_cast %481 : vector<2x8xf32> to vector<1x2x8xf32>
    tpu.vector_store %arg10[%485, %c0_185, %c0_186], %488 {strides = array<i32>} : memref<8x2x8xf32, #tpu.memory_space<vmem>>, vector<1x2x8xf32>,
    %489 = arith.index_cast %436 : i32 to index
    %c0_187 = arith.constant 0 : index
    %c0_188 = arith.constant 0 : index
    %490 = vector.load %arg11[%489, %c0_187, %c0_188] : memref<8x2x8xf32, #tpu.memory_space<vmem>>, vector<1x2x8xf32>
    %491 = vector.shape_cast %490 : vector<1x2x8xf32> to vector<2x8xf32>
    %492 = vector.shape_cast %484 : vector<2x8xf32> to vector<1x2x8xf32>
    tpu.vector_store %arg11[%489, %c0_187, %c0_188], %492 {strides = array<i32>} : memref<8x2x8xf32, #tpu.memory_space<vmem>>, vector<1x2x8xf32>,
    %c8_i32 = arith.constant 8 : i32
    %c0_189 = arith.constant 0 : index
    %c0_190 = arith.constant 0 : index
    %c0_191 = arith.constant 0 : index
    %493 = vector.load %arg12[%c0_189, %c0_190, %c0_191] : memref<2x2x8xf32, #tpu.memory_space<vmem>>, vector<1x2x8xf32>
    %494 = vector.shape_cast %493 : vector<1x2x8xf32> to vector<2x8xf32>
    %495 = vector.shape_cast %481 : vector<2x8xf32> to vector<1x2x8xf32>
    tpu.vector_store %arg12[%c0_189, %c0_190, %c0_191], %495 {strides = array<i32>} : memref<2x2x8xf32, #tpu.memory_space<vmem>>, vector<1x2x8xf32>,
    %c0_192 = arith.constant 0 : index
    %c0_193 = arith.constant 0 : index
    %c0_194 = arith.constant 0 : index
    %496 = vector.load %arg13[%c0_192, %c0_193, %c0_194] : memref<2x2x8xf32, #tpu.memory_space<vmem>>, vector<1x2x8xf32>
    %497 = vector.shape_cast %496 : vector<1x2x8xf32> to vector<2x8xf32>
    %498 = vector.shape_cast %473 : vector<2x8xf32> to vector<1x2x8xf32>
    tpu.vector_store %arg13[%c0_192, %c0_193, %c0_194], %498 {strides = array<i32>} : memref<2x2x8xf32, #tpu.memory_space<vmem>>, vector<1x2x8xf32>,
    %c1_195 = arith.constant 1 : index
    %c0_196 = arith.constant 0 : index
    %c0_197 = arith.constant 0 : index
    %499 = vector.load %arg12[%c1_195, %c0_196, %c0_197] : memref<2x2x8xf32, #tpu.memory_space<vmem>>, vector<1x2x8xf32>
    %500 = vector.shape_cast %499 : vector<1x2x8xf32> to vector<2x8xf32>
    %501 = vector.shape_cast %484 : vector<2x8xf32> to vector<1x2x8xf32>
    tpu.vector_store %arg12[%c1_195, %c0_196, %c0_197], %501 {strides = array<i32>} : memref<2x2x8xf32, #tpu.memory_space<vmem>>, vector<1x2x8xf32>,
    %c1_198 = arith.constant 1 : index
    %c0_199 = arith.constant 0 : index
    %c0_200 = arith.constant 0 : index
    %502 = vector.load %arg13[%c1_198, %c0_199, %c0_200] : memref<2x2x8xf32, #tpu.memory_space<vmem>>, vector<1x2x8xf32>
    %503 = vector.shape_cast %502 : vector<1x2x8xf32> to vector<2x8xf32>
    %504 = vector.shape_cast %478 : vector<2x8xf32> to vector<1x2x8xf32>
    tpu.vector_store %arg13[%c1_198, %c0_199, %c0_200], %504 {strides = array<i32>} : memref<2x2x8xf32, #tpu.memory_space<vmem>>, vector<1x2x8xf32>,
    %c0_201 = arith.constant 0 : index
    %c0_202 = arith.constant 0 : index
    %c0_203 = arith.constant 0 : index
    %505 = vector.load %arg10[%c0_201, %c0_202, %c0_203] : memref<8x2x8xf32, #tpu.memory_space<vmem>>, vector<8x2x8xf32>
    %506 = tpu.transpose %505, [1, 0, 2] : vector<8x2x8xf32> -> vector<2x8x8xf32>
    %c0_204 = arith.constant 0 : index
    %c0_205 = arith.constant 0 : index
    %c0_206 = arith.constant 0 : index
    %507 = vector.load %arg6[%c0_204, %c0_205, %c0_206] : memref<2x8x8xf32, #tpu.memory_space<vmem>>, vector<2x8x8xf32>
    tpu.vector_store %arg6[%c0_204, %c0_205, %c0_206], %506 {strides = array<i32>} : memref<2x8x8xf32, #tpu.memory_space<vmem>>, vector<2x8x8xf32>,
    %c0_207 = arith.constant 0 : index
    %c0_208 = arith.constant 0 : index
    %c0_209 = arith.constant 0 : index
    %508 = vector.load %arg11[%c0_207, %c0_208, %c0_209] : memref<8x2x8xf32, #tpu.memory_space<vmem>>, vector<8x2x8xf32>
    %509 = tpu.transpose %508, [1, 0, 2] : vector<8x2x8xf32> -> vector<2x8x8xf32>
    %c0_210 = arith.constant 0 : index
    %c0_211 = arith.constant 0 : index
    %c0_212 = arith.constant 0 : index
    %510 = vector.load %arg7[%c0_210, %c0_211, %c0_212] : memref<2x8x8xf32, #tpu.memory_space<vmem>>, vector<2x8x8xf32>
    tpu.vector_store %arg7[%c0_210, %c0_211, %c0_212], %509 {strides = array<i32>} : memref<2x8x8xf32, #tpu.memory_space<vmem>>, vector<2x8x8xf32>,
    return
  }
  func.func @transform_0(%arg0: i32) -> (i32, i32, i32) {
    %c0_i32 = arith.constant 0 : i32
    %c0_i32_0 = arith.constant 0 : i32
    %c0_i32_1 = arith.constant 0 : i32
    return %c0_i32, %arg0, %c0_i32_0 : i32, i32, i32
  }
  func.func @transform_1(%arg0: i32) -> (i32, i32, i32) {
    %c0_i32 = arith.constant 0 : i32
    %0 = arith.subi %c0_i32, %arg0 : i32
    %c0_i32_0 = arith.constant 0 : i32
    %c0_i32_1 = arith.constant 0 : i32
    %c0_i32_2 = arith.constant 0 : i32
    return %c0_i32_0, %0, %c0_i32_1 : i32, i32, i32
  }
  func.func @transform_2(%arg0: i32) -> (i32, i32, i32) {
    %c0_i32 = arith.constant 0 : i32
    %c0_i32_0 = arith.constant 0 : i32
    %c0_i32_1 = arith.constant 0 : i32
    %c0_i32_2 = arith.constant 0 : i32
    return %c0_i32, %c0_i32_0, %c0_i32_1 : i32, i32, i32
  }
  func.func @transform_3(%arg0: i32) -> (i32, i32, i32) {
    %c0_i32 = arith.constant 0 : i32
    %c0_i32_0 = arith.constant 0 : i32
    %c0_i32_1 = arith.constant 0 : i32
    %c0_i32_2 = arith.constant 0 : i32
    return %c0_i32, %c0_i32_0, %c0_i32_1 : i32, i32, i32
  }
  func.func @transform_4(%arg0: i32) -> (i32, i32, i32) {
    %c0_i32 = arith.constant 0 : i32
    %c0_i32_0 = arith.constant 0 : i32
    %c0_i32_1 = arith.constant 0 : i32
    %c0_i32_2 = arith.constant 0 : i32
    return %c0_i32, %c0_i32_0, %c0_i32_1 : i32, i32, i32
  }
  func.func @transform_5(%arg0: i32) -> (i32, i32, i32) {
    %c0_i32 = arith.constant 0 : i32
    %c0_i32_0 = arith.constant 0 : i32
    %c0_i32_1 = arith.constant 0 : i32
    return %c0_i32, %arg0, %c0_i32_0 : i32, i32, i32
  }
  func.func @transform_6(%arg0: i32) -> (i32, i32, i32) {
    %c0_i32 = arith.constant 0 : i32
    %0 = arith.subi %c0_i32, %arg0 : i32
    %c0_i32_0 = arith.constant 0 : i32
    %c0_i32_1 = arith.constant 0 : i32
    %c0_i32_2 = arith.constant 0 : i32
    return %c0_i32_0, %0, %c0_i32_1 : i32, i32, i32
  }
}

</mosaic_0001>

<llo_original>
// kernel: tpu_custom_call.1
$region0: #{tpu_custom_call.1}
  #allocation0 [shape = 'u32[]', space=smem, size = 0x4, offset = 0x4, fixed_abs, tag = 'smem constant byte address 0x4 - core index']
  #allocation1 [shape = 'u32[72,128]{1,0:T(1,128)}', space=vmem, size = 0x9000, scoped, tag = 'internal scratch']
  #allocation2 [shape = 'f32[8,2,32]{2,1,0:T(2,128)}', space=vmem, size = 0x2000, scoped, tag = 'scratch operand']
  #allocation3 [shape = 'f32[8,2,32]{2,1,0:T(2,128)}', space=vmem, size = 0x2000, scoped, tag = 'scratch operand']
  #allocation4 [shape = 'f32[8,2,8]{2,1,0:T(2,128)}', space=vmem, size = 0x2000, scoped, tag = 'scratch operand']
  #allocation5 [shape = 'f32[8,2,8]{2,1,0:T(2,128)}', space=vmem, size = 0x2000, scoped, tag = 'scratch operand']
  #allocation6 [shape = 'f32[2,2,8]{2,1,0:T(2,128)}', space=vmem, size = 0x800, scoped, tag = 'scratch operand']
  #allocation7 [shape = 'f32[2,2,8]{2,1,0:T(2,128)}', space=vmem, size = 0x800, scoped, tag = 'scratch operand']
  %s0 = inlined_call_operand.hbm [shape: bf16[2,8,32], index: 0, kind: input, shape index: {}]
  %s1 = inlined_call_operand.hbm [shape: bf16[2,8,32], index: 1, kind: input, shape index: {}]
  %s2 = inlined_call_operand.hbm [shape: bf16[2,32,32], index: 2, kind: input, shape index: {}]
  %s3 = inlined_call_operand.vmem [shape: f32[2,1,32], index: 3, kind: input, shape index: {}]
  %s4 = inlined_call_operand.hbm [shape: bf16[2,8,32], index: 4, kind: input, shape index: {}]
  %s5 = inlined_call_operand.hbm [shape: f32[2,8,8], index: 5, kind: output, shape index: {0}]
  %s6 = inlined_call_operand.hbm [shape: f32[2,8,8], index: 6, kind: output, shape index: {1}]
  %7 = xla_tuple %s5, %s6
  %s8 = sld [smem:[#allocation0]]
  $region58: #{tpu_custom_call.1} parent=0
    _
  %s10 = ssub.s32 1, %s8
  %s11 = scalar_select 0, %s10, %s8
  $region1: #{tpu_custom_call.1} parent=0
    #allocation8 [shape = 'u8[4096]{0}', space=vmem, size = 0x1000, scoped, tag = 'input window, operand 0, single buffered']
    #allocation9 [shape = 's32[1]{0}', space=sflag, size = 0x4, scoped, tag = 'scoped memory for tpu_custom_call.1']
    #allocation10 [shape = 's32[1]{0}', space=sflag, size = 0x4, scoped, tag = 'scoped memory for tpu_custom_call.1']
    #allocation11 [shape = 'u8[4096]{0}', space=vmem, size = 0x1000, scoped, tag = 'input window, operand 1, single buffered']
    #allocation12 [shape = 's32[1]{0}', space=sflag, size = 0x4, scoped, tag = 'scoped memory for tpu_custom_call.1']
    #allocation13 [shape = 'u8[16384]{0}', space=vmem, size = 0x4000, scoped, tag = 'input window, operand 2, single buffered']
    #allocation14 [shape = 'u8[4096]{0}', space=vmem, size = 0x1000, scoped, tag = 'input window, operand 4, single buffered']
    #allocation15 [shape = 's32[1]{0}', space=sflag, size = 0x4, scoped, tag = 'scoped memory for tpu_custom_call.1']
    #allocation16 [shape = 'u8[8192]{0}', space=vmem, size = 0x2000, scoped, tag = 'output window, operand 0, single buffered']
    #allocation17 [shape = 'u8[8192]{0}', space=vmem, size = 0x2000, scoped, tag = 'output window, operand 1, single buffered']
    #allocation18 [shape = 's32[1]{0}', space=sflag, size = 0x4, scoped, tag = 'scoped memory for tpu_custom_call.1']
    %12 = vsyncpa [#allocation9], 0
    %13 = vsyncpa [#allocation12], 0
    %14 = vsyncpa [#allocation15], 0
    %15 = vsyncpa [#allocation10], 0
    %16 = vsyncpa [#allocation18], 0
    // Predicated region
    $region2: #{tpu_custom_call.1} parent=1 // pred_check
      _
    $region3: #{tpu_custom_call.1} parent=1 // pred_check_branch
      %18 = sbr.rel (0) target = $region5
    $region4: #{tpu_custom_call.1} parent=1 // pred_region
      %20 = vsyncadd [#allocation9], 0
      %s21 = sshll.u32 %s0, 4
      %s22 = int_to_ptr.hbm [resolvable:$true] %s21
      %s23 = sshll.u32 [#allocation8], 4
      %s24 = int_to_ptr.vmem [resolvable:$true] %s23
      %29 = dma.hbm_to_vmem [thread:$0]  %s22, 128, %s24, [#allocation9], 64, 64, 4
    $region5: #{tpu_custom_call.1} parent=1 // pred_fallthru
      _
    // Predicated region
    $region6: #{tpu_custom_call.1} parent=1 // pred_check
      _
    $region7: #{tpu_custom_call.1} parent=1 // pred_check_branch
      %31 = sbr.rel (0) target = $region9
    $region8: #{tpu_custom_call.1} parent=1 // pred_region
      %s32 = ssub.s32 0, 0
      %34 = vsyncadd [#allocation12], 0
      %s35 = smul.addr %s32, 4
      %s36 = scalar_lea.hbm %s1, %s35
      %s37 = sshll.u32 %s36, 4
      %s38 = int_to_ptr.hbm [resolvable:$true] %s37
      %s39 = sshll.u32 [#allocation11], 4
      %s40 = int_to_ptr.vmem [resolvable:$true] %s39
      %45 = dma.hbm_to_vmem [thread:$0]  %s38, 128, %s40, [#allocation12], 64, 64, 4
    $region9: #{tpu_custom_call.1} parent=1 // pred_fallthru
      _
    // Predicated region
    $region10: #{tpu_custom_call.1} parent=1 // pred_check
      _
    $region11: #{tpu_custom_call.1} parent=1 // pred_check_branch
      %47 = sbr.rel (0) target = $region13
    $region12: #{tpu_custom_call.1} parent=1 // pred_region
      %49 = vsyncadd [#allocation12], 0
      %s50 = sshll.u32 %s2, 4
      %s51 = int_to_ptr.hbm [resolvable:$true] %s50
      %s52 = sshll.u32 [#allocation13], 4
      %s53 = int_to_ptr.vmem [resolvable:$true] %s52
      %58 = dma.hbm_to_vmem [thread:$0]  %s51, 512, %s53, [#allocation12], 64, 64, 4
    $region13: #{tpu_custom_call.1} parent=1 // pred_fallthru
      _
    // Predicated region
    $region14: #{tpu_custom_call.1} parent=1 // pred_check
      _
    $region15: #{tpu_custom_call.1} parent=1 // pred_check_branch
      %60 = sbr.rel (0) target = $region17
    $region16: #{tpu_custom_call.1} parent=1 // pred_region
      _
    $region17: #{tpu_custom_call.1} parent=1 // pred_fallthru
      _
    // Predicated region
    $region18: #{tpu_custom_call.1} parent=1 // pred_check
      _
    $region19: #{tpu_custom_call.1} parent=1 // pred_check_branch
      %62 = sbr.rel (0) target = $region21
    $region20: #{tpu_custom_call.1} parent=1 // pred_region
      %64 = vsyncadd [#allocation15], 0
      %s65 = sshll.u32 %s4, 4
      %s66 = int_to_ptr.hbm [resolvable:$true] %s65
      %s67 = sshll.u32 [#allocation14], 4
      %s68 = int_to_ptr.vmem [resolvable:$true] %s67
      %73 = dma.hbm_to_vmem [thread:$0]  %s66, 128, %s68, [#allocation15], 64, 64, 4
    $region21: #{tpu_custom_call.1} parent=1 // pred_fallthru
      _
    // Predicated region
    $region22: #{tpu_custom_call.1} parent=1 // pred_check
      _
    $region23: #{tpu_custom_call.1} parent=1 // pred_check_branch
      %75 = sbr.rel (0) target = $region25
    $region24: #{tpu_custom_call.1} parent=1 // pred_region
      %77 = dma.done [#allocation9], 128
    $region25: #{tpu_custom_call.1} parent=1 // pred_fallthru
      _
    // Predicated region
    $region26: #{tpu_custom_call.1} parent=1 // pred_check
      _
    $region27: #{tpu_custom_call.1} parent=1 // pred_check_branch
      %79 = sbr.rel (0) target = $region29
    $region28: #{tpu_custom_call.1} parent=1 // pred_region
      %81 = dma.done [#allocation12], 128
    $region29: #{tpu_custom_call.1} parent=1 // pred_fallthru
      _
    // Predicated region
    $region30: #{tpu_custom_call.1} parent=1 // pred_check
      _
    $region31: #{tpu_custom_call.1} parent=1 // pred_check_branch
      %83 = sbr.rel (0) target = $region33
    $region32: #{tpu_custom_call.1} parent=1 // pred_region
      %85 = dma.done [#allocation12], 512
    $region33: #{tpu_custom_call.1} parent=1 // pred_fallthru
      _
    // Predicated region
    $region34: #{tpu_custom_call.1} parent=1 // pred_check
      _
    $region35: #{tpu_custom_call.1} parent=1 // pred_check_branch
      %87 = sbr.rel (0) target = $region37
    $region36: #{tpu_custom_call.1} parent=1 // pred_region
      %89 = dma.done [#allocation15], 128
    $region37: #{tpu_custom_call.1} parent=1 // pred_fallthru
      _
    %s90 = ssub.s32 0, 0
    %s91 = ssub.s32 0, 0
    %p93 = scmp.eq.s32.totalorder 0, 0
    // Predicated region
    $region38: #{tpu_custom_call.1} parent=1 // pred_check
      %p94 = pneg %p93
    $region39: #{tpu_custom_call.1} parent=1 // pred_check_branch
      %96 = sbr.rel (%p94) target = $region41
    $region40: #{tpu_custom_call.1} parent=1 // pred_region
      %vm97 = vcmask 58368
      %98 = vst.msk [vmem:[#allocation6] sm:$0x3] %vm97, 0.0
      %99 = vst.msk [vmem:[#allocation6 + $0x2] sm:$0x3] %vm97, 0.0
      %100 = vst.msk [vmem:[#allocation7] sm:$0x3] %vm97, 0.0
      %101 = vst.msk [vmem:[#allocation7 + $0x2] sm:$0x3] %vm97, 0.0
    $region41: #{tpu_custom_call.1} parent=1 // pred_fallthru
      _
    %v102 = vld [vmem:[#allocation8] sm:$0xf]
    %v103 = vld [vmem:[#allocation8 + $0x4] sm:$0xf]
    %v104 = vld [vmem:[#allocation13] sm:$0xf]
    %v105 = vld [vmem:[#allocation13 + $0x4] sm:$0xf]
    %v106 = vld [vmem:[#allocation13 + $0x8] sm:$0xf]
    %v107 = vld [vmem:[#allocation13 + $0xc] sm:$0xf]
    %v110 = vunpack.c.l.b16 %v102
    %v111 = vunpack.c.l.b16 %v103
    %v112 = vpack.c.b16 %v111, %v110
    %v117 = vunpack.c.l.b16 %v104
    %v118 = vunpack.c.l.b16 %v105
    %v119 = vunpack.c.l.b16 %v106
    %v120 = vunpack.c.l.b16 %v107
    %v121 = vpack.c.b16 %v118, %v117
    %v122 = vpack.c.b16 %v120, %v119
    %vm125 = vcmask 261120
    %v127 = vsel %vm125, %v112, 0
    %129 = vmatpush.bf16.msra.mxu0 0
    %130 = vmatpush.bf16.msra.mxu0 0
    %131 = vmatpush.bf16.msra.mxu0 0
    %132 = vmatpush.bf16.msra.mxu0 0
    %133 = vmatpush.bf16.msra.mxu0 0
    %134 = vmatpush.bf16.msra.mxu0 0
    %135 = vmatpush.bf16.msra.mxu0 %v122
    %136 = vmatpush.bf16.msra.mxu0 %v121
    %137 = vmatmul.bf16.gmra.mxu0 %v127
    %v138 = vpop.f32.mrf.mxu0
    %v139 = vadd.f32 0.0, %v138
    %v140 = vpop.f32.mrf.mxu0
    %v141 = vadd.f32 0.0, %v140
    %142 = vdwg.mxu0
    %v143 = vld [vmem:[%s3] sm:$0x1]
    %v145 = vperm.slane %v143, 0
    %v147 = vadd.f32 %v139, %v145
    %v148 = vadd.f32 %v141, %v145
    %v149 = vrot.slane %v147, 4
    %vm150 = vcmask 1047556
    %v151 = vsel %vm150, 0.0, %v149
    %v153 = vunpack.c.l.s4 1983009808
    %v154 = vunpack.c.0.s8 %v153
    %v155 = vperm.slane %v147, %v154
    %v157 = vunpack.c.l.s4 1983009808
    %v158 = vunpack.c.0.s8 %v157
    %v159 = vperm.slane %v151, %v158
    %v160 = vrot.slane %v148, 4
    %v161 = vsel %vm150, 0.0, %v160
    %v163 = vunpack.c.l.s4 1983009808
    %v164 = vunpack.c.0.s8 %v163
    %v165 = vperm.slane %v148, %v164
    %v167 = vunpack.c.l.s4 1983009808
    %v168 = vunpack.c.0.s8 %v167
    %v169 = vperm.slane %v161, %v168
    %v170 = vrot.slane %v165, 4
    %v171 = vsel %vm150, %v170, %v155
    %v172 = vrot.slane %v155, 4
    %v173 = vsel %vm150, %v165, %v172
    %v175 = vunpack.c.l.s4 1934713408
    %v176 = vunpack.c.0.s8 %v175
    %v177 = vperm.slane %v171, %v176
    %v179 = vunpack.c.l.s4 1934713408
    %v180 = vunpack.c.0.s8 %v179
    %v181 = vperm.slane %v173, %v180
    %v182 = vrot.slane %v169, 4
    %v183 = vsel %vm150, %v182, %v159
    %v184 = vrot.slane %v159, 4
    %v185 = vsel %vm150, %v169, %v184
    %v187 = vunpack.c.l.s4 1934713408
    %v188 = vunpack.c.0.s8 %v187
    %v189 = vperm.slane %v183, %v188
    %v191 = vunpack.c.l.s4 1934713408
    %v192 = vunpack.c.0.s8 %v191
    %v193 = vperm.slane %v185, %v192
    %v194 = vrot.slane %v177, 4
    %v195 = vsel %vm150, 0.0, %v194
    %v196 = vrot.slane %v181, 4
    %v197 = vsel %vm150, 0.0, %v196
    %v198 = vrot.slane %v189, 4
    %v199 = vsel %vm150, 0.0, %v198
    %v200 = vrot.slane %v193, 4
    %v201 = vsel %vm150, 0.0, %v200
    %vm202 = vcmask 254976
    %203 = vst.msk [vmem:[#allocation2] sm:$0x3] %vm202, %v177
    %204 = vst.msk [vmem:[#allocation2 + $0x2] sm:$0x3] %vm202, %v195
    %205 = vst.msk [vmem:[#allocation2 + $0x4] sm:$0x3] %vm202, %v181
    %206 = vst.msk [vmem:[#allocation2 + $0x6] sm:$0x3] %vm202, %v197
    %207 = vst.msk [vmem:[#allocation2 + $0x8] sm:$0x3] %vm202, %v189
    %208 = vst.msk [vmem:[#allocation2 + $0xa] sm:$0x3] %vm202, %v199
    %209 = vst.msk [vmem:[#allocation2 + $0xc] sm:$0x3] %vm202, %v193
    %210 = vst.msk [vmem:[#allocation2 + $0xe] sm:$0x3] %vm202, %v201
    %v211 = vld [vmem:[#allocation11] sm:$0xf]
    %v212 = vld [vmem:[#allocation11 + $0x4] sm:$0xf]
    %s213 = scalar_lea.vmem [#allocation13], 16
    %v214 = vld [vmem:[%s213] sm:$0xf]
    %v215 = vld [vmem:[%s213 + $0x4] sm:$0xf]
    %v216 = vld [vmem:[%s213 + $0x8] sm:$0xf]
    %v217 = vld [vmem:[%s213 + $0xc] sm:$0xf]
    %v220 = vunpack.c.l.b16 %v211
    %v221 = vunpack.c.l.b16 %v212
    %v222 = vpack.c.b16 %v221, %v220
    %v227 = vunpack.c.l.b16 %v214
    %v228 = vunpack.c.l.b16 %v215
    %v229 = vunpack.c.l.b16 %v216
    %v230 = vunpack.c.l.b16 %v217
    %v231 = vpack.c.b16 %v228, %v227
    %v232 = vpack.c.b16 %v230, %v229
    %v236 = vsel %vm125, %v222, 0
    %238 = vmatpush.bf16.msra.mxu0 0
    %239 = vmatpush.bf16.msra.mxu0 0
    %240 = vmatpush.bf16.msra.mxu0 0
    %241 = vmatpush.bf16.msra.mxu0 0
    %242 = vmatpush.bf16.msra.mxu0 0
    %243 = vmatpush.bf16.msra.mxu0 0
    %244 = vmatpush.bf16.msra.mxu0 %v232
    %245 = vmatpush.bf16.msra.mxu0 %v231
    %246 = vmatmul.bf16.gmra.mxu0 %v236
    %v247 = vpop.f32.mrf.mxu0
    %v248 = vadd.f32 0.0, %v247
    %v249 = vpop.f32.mrf.mxu0
    %v250 = vadd.f32 0.0, %v249
    %251 = vdwg.mxu0
    %s252 = scalar_lea.vmem %s3, 1
    %v253 = vld [vmem:[%s252] sm:$0x1]
    %v255 = vperm.slane %v253, 0
    %v257 = vadd.f32 %v248, %v255
    %v258 = vadd.f32 %v250, %v255
    %v259 = vrot.slane %v257, 4
    %v260 = vsel %vm150, 0.0, %v259
    %v262 = vunpack.c.l.s4 1983009808
    %v263 = vunpack.c.0.s8 %v262
    %v264 = vperm.slane %v257, %v263
    %v266 = vunpack.c.l.s4 1983009808
    %v267 = vunpack.c.0.s8 %v266
    %v268 = vperm.slane %v260, %v267
    %v269 = vrot.slane %v258, 4
    %v270 = vsel %vm150, 0.0, %v269
    %v272 = vunpack.c.l.s4 1983009808
    %v273 = vunpack.c.0.s8 %v272
    %v274 = vperm.slane %v258, %v273
    %v276 = vunpack.c.l.s4 1983009808
    %v277 = vunpack.c.0.s8 %v276
    %v278 = vperm.slane %v270, %v277
    %v279 = vrot.slane %v274, 4
    %v280 = vsel %vm150, %v279, %v264
    %v281 = vrot.slane %v264, 4
    %v282 = vsel %vm150, %v274, %v281
    %v284 = vunpack.c.l.s4 1934713408
    %v285 = vunpack.c.0.s8 %v284
    %v286 = vperm.slane %v280, %v285
    %v288 = vunpack.c.l.s4 1934713408
    %v289 = vunpack.c.0.s8 %v288
    %v290 = vperm.slane %v282, %v289
    %v291 = vrot.slane %v278, 4
    %v292 = vsel %vm150, %v291, %v268
    %v293 = vrot.slane %v268, 4
    %v294 = vsel %vm150, %v278, %v293
    %v296 = vunpack.c.l.s4 1934713408
    %v297 = vunpack.c.0.s8 %v296
    %v298 = vperm.slane %v292, %v297
    %v300 = vunpack.c.l.s4 1934713408
    %v301 = vunpack.c.0.s8 %v300
    %v302 = vperm.slane %v294, %v301
    %v303 = vrot.slane %v286, 4
    %v304 = vsel %vm150, 0.0, %v303
    %v305 = vrot.slane %v290, 4
    %v306 = vsel %vm150, 0.0, %v305
    %v307 = vrot.slane %v298, 4
    %v308 = vsel %vm150, 0.0, %v307
    %v309 = vrot.slane %v302, 4
    %v310 = vsel %vm150, 0.0, %v309
    %311 = vst.msk [vmem:[#allocation3] sm:$0x3] %vm202, %v286
    %312 = vst.msk [vmem:[#allocation3 + $0x2] sm:$0x3] %vm202, %v304
    %313 = vst.msk [vmem:[#allocation3 + $0x4] sm:$0x3] %vm202, %v290
    %314 = vst.msk [vmem:[#allocation3 + $0x6] sm:$0x3] %vm202, %v306
    %315 = vst.msk [vmem:[#allocation3 + $0x8] sm:$0x3] %vm202, %v298
    %316 = vst.msk [vmem:[#allocation3 + $0xa] sm:$0x3] %vm202, %v308
    %317 = vst.msk [vmem:[#allocation3 + $0xc] sm:$0x3] %vm202, %v302
    %318 = vst.msk [vmem:[#allocation3 + $0xe] sm:$0x3] %vm202, %v310
    %v319 = vld [vmem:[#allocation6] sm:$0x3]
    %v320 = vld [vmem:[#allocation7] sm:$0x3]
    %s321 = scalar_lea.vmem [#allocation6], 2
    %v322 = vld [vmem:[%s321] sm:$0x3]
    %s323 = scalar_lea.vmem [#allocation7], 2
    %v324 = vld [vmem:[%s323] sm:$0x3]
    %v325 = vld [vmem:[#allocation2] sm:$0x3]
    %v326 = vpack.c.bf16 %v319, %v319
    %v327 = vld [vmem:[#allocation14] sm:$0xf]
    %vm328 = vcmask 64512
    %v330 = vsel %vm328, %v326, 0
    %vm332 = vcmask 1043456
    %v334 = vsel %vm332, %v327, 0
    %336 = vmatpush.bf16.msra.mxu0 0
    %337 = vmatpush.bf16.msra.mxu0 0
    %338 = vmatpush.bf16.msra.mxu0 0
    %339 = vmatpush.bf16.msra.mxu0 0
    %340 = vmatpush.bf16.msra.mxu0 0
    %341 = vmatpush.bf16.msra.mxu0 0
    %342 = vmatpush.bf16.msra.mxu0 0
    %343 = vmatpush.bf16.msra.mxu0 %v334
    %344 = vmatmul.bf16.gmra.mxu0 %v330
    %v345 = vpop.f32.mrf.mxu0
    %v346 = vadd.f32 0.0, %v345
    %v347 = vpop.f32.mrf.mxu0
    %348 = vdwg.mxu0
    %v349 = vadd.f32 %v325, %v346
    %s350 = scalar_lea.vmem [#allocation3], 14
    %v351 = vld [vmem:[%s350] sm:$0x3]
    %v352 = vpack.c.bf16 %v322, %v322
    %s353 = scalar_lea.vmem [#allocation14], 4
    %v354 = vld [vmem:[%s353] sm:$0xf]
    %v356 = vsel %vm328, %v352, 0
    %v359 = vsel %vm332, %v354, 0
    %361 = vmatpush.bf16.msra.mxu0 0
    %362 = vmatpush.bf16.msra.mxu0 0
    %363 = vmatpush.bf16.msra.mxu0 0
    %364 = vmatpush.bf16.msra.mxu0 0
    %365 = vmatpush.bf16.msra.mxu0 0
    %366 = vmatpush.bf16.msra.mxu0 0
    %367 = vmatpush.bf16.msra.mxu0 0
    %368 = vmatpush.bf16.msra.mxu0 %v359
    %369 = vmatmul.bf16.gmra.mxu0 %v356
    %v370 = vpop.f32.mrf.mxu0
    %v371 = vadd.f32 0.0, %v370
    %v372 = vpop.f32.mrf.mxu0
    %373 = vdwg.mxu0
    %v374 = vadd.f32 %v351, %v371
    %v375 = vxor.u32 %v349, 2147483648
    %v376 = vmul.f32 %v375, 1.442695
    %v377 = vpow.pop %v376
    %v378 = vadd.f32 %v377, 1.0
    %v379 = vrcp.pop %v378
    %v380 = vmul.f32 %v378, %v379
    %v381 = vsub.f32 1.0, %v380
    %v382 = vmul.f32 %v379, %v381
    %v383 = vadd.f32 %v379, %v382
    %vm384 = vweird.f32 %v378
    %vm385 = vweird.f32 %v379
    %vm386 = vmor %vm384, %vm385
    %v387 = vsel %vm386, %v379, %v383
    %v388 = vand.u32 2147483647, %v378
    %vm389 = vcmp.eq.f32.partialorder %v388, 8.507059e+37
    %v390 = vand.u32 %v378, 2147483648
    %v391 = vor.u32 1.1754944e-38, %v390
    %v392 = vsel %vm389, %v391, %v387
    %v393 = vmul.f32 1.0, %v392
    %v394 = vxor.u32 %v374, 2147483648
    %v395 = vmul.f32 %v394, 1.442695
    %v396 = vpow.pop %v395
    %v397 = vadd.f32 %v396, 1.0
    %v398 = vrcp.pop %v397
    %v399 = vmul.f32 %v397, %v398
    %v400 = vsub.f32 1.0, %v399
    %v401 = vmul.f32 %v398, %v400
    %v402 = vadd.f32 %v398, %v401
    %vm403 = vweird.f32 %v397
    %vm404 = vweird.f32 %v398
    %vm405 = vmor %vm403, %vm404
    %v406 = vsel %vm405, %v398, %v402
    %v407 = vand.u32 2147483647, %v397
    %vm408 = vcmp.eq.f32.partialorder %v407, 8.507059e+37
    %v409 = vand.u32 %v397, 2147483648
    %v410 = vor.u32 1.1754944e-38, %v409
    %v411 = vsel %vm408, %v410, %v406
    %v412 = vmul.f32 1.0, %v411
    %v413 = vtanh.pop %v349
    %v414 = vtanh.pop %v374
    %416 = vrot.lane.b32.xlu0 %v320, 8
    %v417 = vpop.permute.xlu0 %416
    %v419 = vmul.f32 %v393, %v417
    %421 = vrot.lane.b32.xlu0 %v413, 104
    %v422 = vpop.permute.xlu0 %421
    %v424 = vmul.f32 %v393, %v422
    %426 = vrot.lane.b32.xlu0 %v424, 8
    %v427 = vpop.permute.xlu0 %426
    %v429 = vadd.f32 %v419, %v427
    %431 = vrot.lane.b32.xlu0 %v324, 8
    %v432 = vpop.permute.xlu0 %431
    %v434 = vmul.f32 %v412, %v432
    %436 = vrot.lane.b32.xlu0 %v414, 104
    %v437 = vpop.permute.xlu0 %436
    %v439 = vmul.f32 %v412, %v437
    %441 = vrot.lane.b32.xlu0 %v439, 8
    %v442 = vpop.permute.xlu0 %441
    %v444 = vadd.f32 %v434, %v442
    %v445 = vtanh.pop %v429
    %447 = vrot.lane.b32.xlu0 %v445, 8
    %v448 = vpop.permute.xlu0 %447
    %v450 = vmul.f32 %v393, %v448
    %v451 = vtanh.pop %v444
    %453 = vrot.lane.b32.xlu0 %v451, 8
    %v454 = vpop.permute.xlu0 %453
    %v456 = vmul.f32 %v412, %v454
    %458 = vrot.lane.b32.xlu0 %v450, 112
    %v459 = vpop.permute.xlu0 %458
    %vm461 = vcmask 58368
    %462 = vst.msk [vmem:[#allocation4] sm:$0x3] %vm461, %v459
    %464 = vrot.lane.b32.xlu0 %v456, 112
    %v465 = vpop.permute.xlu0 %464
    %s467 = scalar_lea.vmem [#allocation5], 14
    %468 = vst.msk [vmem:[%s467] sm:$0x3] %vm461, %v465
    %s469 = scalar_lea.vmem [#allocation2], 2
    %v470 = vld [vmem:[%s469] sm:$0x3]
    %v471 = vpack.c.bf16 %v450, %v450
    %v472 = vld [vmem:[#allocation14] sm:$0xf]
    %474 = vrot.lane.b32.xlu0 %v471, 112
    %v475 = vpop.permute.xlu0 %474
    %v477 = vsel %vm328, %v475, 0
    %v480 = vsel %vm332, %v472, 0
    %482 = vmatpush.bf16.msra.mxu0 0
    %483 = vmatpush.bf16.msra.mxu0 0
    %484 = vmatpush.bf16.msra.mxu0 0
    %485 = vmatpush.bf16.msra.mxu0 0
    %486 = vmatpush.bf16.msra.mxu0 0
    %487 = vmatpush.bf16.msra.mxu0 0
    %488 = vmatpush.bf16.msra.mxu0 0
    %489 = vmatpush.bf16.msra.mxu0 %v480
    %490 = vmatmul.bf16.gmra.mxu0 %v477
    %v491 = vpop.f32.mrf.mxu0
    %v492 = vadd.f32 0.0, %v491
    %v493 = vpop.f32.mrf.mxu0
    %494 = vdwg.mxu0
    %v495 = vadd.f32 %v470, %v492
    %s496 = scalar_lea.vmem [#allocation3], 12
    %v497 = vld [vmem:[%s496] sm:$0x3]
    %v498 = vpack.c.bf16 %v456, %v456
    %v499 = vld [vmem:[%s353] sm:$0xf]
    %501 = vrot.lane.b32.xlu0 %v498, 112
    %v502 = vpop.permute.xlu0 %501
    %v504 = vsel %vm328, %v502, 0
    %v507 = vsel %vm332, %v499, 0
    %509 = vmatpush.bf16.msra.mxu0 0
    %510 = vmatpush.bf16.msra.mxu0 0
    %511 = vmatpush.bf16.msra.mxu0 0
    %512 = vmatpush.bf16.msra.mxu0 0
    %513 = vmatpush.bf16.msra.mxu0 0
    %514 = vmatpush.bf16.msra.mxu0 0
    %515 = vmatpush.bf16.msra.mxu0 0
    %516 = vmatpush.bf16.msra.mxu0 %v507
    %517 = vmatmul.bf16.gmra.mxu0 %v504
    %v518 = vpop.f32.mrf.mxu0
    %v519 = vadd.f32 0.0, %v518
    %v520 = vpop.f32.mrf.mxu0
    %521 = vdwg.mxu0
    %v522 = vadd.f32 %v497, %v519
    %v523 = vxor.u32 %v495, 2147483648
    %v524 = vmul.f32 %v523, 1.442695
    %v525 = vpow.pop %v524
    %v526 = vadd.f32 %v525, 1.0
    %v527 = vrcp.pop %v526
    %v528 = vmul.f32 %v526, %v527
    %v529 = vsub.f32 1.0, %v528
    %v530 = vmul.f32 %v527, %v529
    %v531 = vadd.f32 %v527, %v530
    %vm532 = vweird.f32 %v526
    %vm533 = vweird.f32 %v527
    %vm534 = vmor %vm532, %vm533
    %v535 = vsel %vm534, %v527, %v531
    %v536 = vand.u32 2147483647, %v526
    %vm537 = vcmp.eq.f32.partialorder %v536, 8.507059e+37
    %v538 = vand.u32 %v526, 2147483648
    %v539 = vor.u32 1.1754944e-38, %v538
    %v540 = vsel %vm537, %v539, %v535
    %v541 = vmul.f32 1.0, %v540
    %v542 = vxor.u32 %v522, 2147483648
    %v543 = vmul.f32 %v542, 1.442695
    %v544 = vpow.pop %v543
    %v545 = vadd.f32 %v544, 1.0
    %v546 = vrcp.pop %v545
    %v547 = vmul.f32 %v545, %v546
    %v548 = vsub.f32 1.0, %v547
    %v549 = vmul.f32 %v546, %v548
    %v550 = vadd.f32 %v546, %v549
    %vm551 = vweird.f32 %v545
    %vm552 = vweird.f32 %v546
    %vm553 = vmor %vm551, %vm552
    %v554 = vsel %vm553, %v546, %v550
    %v555 = vand.u32 2147483647, %v545
    %vm556 = vcmp.eq.f32.partialorder %v555, 8.507059e+37
    %v557 = vand.u32 %v545, 2147483648
    %v558 = vor.u32 1.1754944e-38, %v557
    %v559 = vsel %vm556, %v558, %v554
    %v560 = vmul.f32 1.0, %v559
    %v561 = vtanh.pop %v495
    %v562 = vtanh.pop %v522
    %v563 = vmul.f32 %v541, %v429
    %565 = vrot.lane.b32.xlu0 %v561, 104
    %v566 = vpop.permute.xlu0 %565
    %v568 = vmul.f32 %v541, %v566
    %570 = vrot.lane.b32.xlu0 %v568, 8
    %v571 = vpop.permute.xlu0 %570
    %v573 = vadd.f32 %v563, %v571
    %v574 = vmul.f32 %v560, %v444
    %576 = vrot.lane.b32.xlu0 %v562, 104
    %v577 = vpop.permute.xlu0 %576
    %v579 = vmul.f32 %v560, %v577
    %581 = vrot.lane.b32.xlu0 %v579, 8
    %v582 = vpop.permute.xlu0 %581
    %v584 = vadd.f32 %v574, %v582
    %v585 = vtanh.pop %v573
    %587 = vrot.lane.b32.xlu0 %v585, 8
    %v588 = vpop.permute.xlu0 %587
    %v590 = vmul.f32 %v541, %v588
    %v591 = vtanh.pop %v584
    %593 = vrot.lane.b32.xlu0 %v591, 8
    %v594 = vpop.permute.xlu0 %593
    %v596 = vmul.f32 %v560, %v594
    %598 = vrot.lane.b32.xlu0 %v590, 112
    %v599 = vpop.permute.xlu0 %598
    %s601 = scalar_lea.vmem [#allocation4], 2
    %602 = vst.msk [vmem:[%s601] sm:$0x3] %vm461, %v599
    %604 = vrot.lane.b32.xlu0 %v596, 112
    %v605 = vpop.permute.xlu0 %604
    %s607 = scalar_lea.vmem [#allocation5], 12
    %608 = vst.msk [vmem:[%s607] sm:$0x3] %vm461, %v605
    %s609 = scalar_lea.vmem [#allocation2], 4
    %v610 = vld [vmem:[%s609] sm:$0x3]
    %v611 = vpack.c.bf16 %v590, %v590
    %v612 = vld [vmem:[#allocation14] sm:$0xf]
    %614 = vrot.lane.b32.xlu0 %v611, 112
    %v615 = vpop.permute.xlu0 %614
    %v617 = vsel %vm328, %v615, 0
    %v620 = vsel %vm332, %v612, 0
    %622 = vmatpush.bf16.msra.mxu0 0
    %623 = vmatpush.bf16.msra.mxu0 0
    %624 = vmatpush.bf16.msra.mxu0 0
    %625 = vmatpush.bf16.msra.mxu0 0
    %626 = vmatpush.bf16.msra.mxu0 0
    %627 = vmatpush.bf16.msra.mxu0 0
    %628 = vmatpush.bf16.msra.mxu0 0
    %629 = vmatpush.bf16.msra.mxu0 %v620
    %630 = vmatmul.bf16.gmra.mxu0 %v617
    %v631 = vpop.f32.mrf.mxu0
    %v632 = vadd.f32 0.0, %v631
    %v633 = vpop.f32.mrf.mxu0
    %634 = vdwg.mxu0
    %v635 = vadd.f32 %v610, %v632
    %s636 = scalar_lea.vmem [#allocation3], 10
    %v637 = vld [vmem:[%s636] sm:$0x3]
    %v638 = vpack.c.bf16 %v596, %v596
    %v639 = vld [vmem:[%s353] sm:$0xf]
    %641 = vrot.lane.b32.xlu0 %v638, 112
    %v642 = vpop.permute.xlu0 %641
    %v644 = vsel %vm328, %v642, 0
    %v647 = vsel %vm332, %v639, 0
    %649 = vmatpush.bf16.msra.mxu0 0
    %650 = vmatpush.bf16.msra.mxu0 0
    %651 = vmatpush.bf16.msra.mxu0 0
    %652 = vmatpush.bf16.msra.mxu0 0
    %653 = vmatpush.bf16.msra.mxu0 0
    %654 = vmatpush.bf16.msra.mxu0 0
    %655 = vmatpush.bf16.msra.mxu0 0
    %656 = vmatpush.bf16.msra.mxu0 %v647
    %657 = vmatmul.bf16.gmra.mxu0 %v644
    %v658 = vpop.f32.mrf.mxu0
    %v659 = vadd.f32 0.0, %v658
    %v660 = vpop.f32.mrf.mxu0
    %661 = vdwg.mxu0
    %v662 = vadd.f32 %v637, %v659
    %v663 = vxor.u32 %v635, 2147483648
    %v664 = vmul.f32 %v663, 1.442695
    %v665 = vpow.pop %v664
    %v666 = vadd.f32 %v665, 1.0
    %v667 = vrcp.pop %v666
    %v668 = vmul.f32 %v666, %v667
    %v669 = vsub.f32 1.0, %v668
    %v670 = vmul.f32 %v667, %v669
    %v671 = vadd.f32 %v667, %v670
    %vm672 = vweird.f32 %v666
    %vm673 = vweird.f32 %v667
    %vm674 = vmor %vm672, %vm673
    %v675 = vsel %vm674, %v667, %v671
    %v676 = vand.u32 2147483647, %v666
    %vm677 = vcmp.eq.f32.partialorder %v676, 8.507059e+37
    %v678 = vand.u32 %v666, 2147483648
    %v679 = vor.u32 1.1754944e-38, %v678
    %v680 = vsel %vm677, %v679, %v675
    %v681 = vmul.f32 1.0, %v680
    %v682 = vxor.u32 %v662, 2147483648
    %v683 = vmul.f32 %v682, 1.442695
    %v684 = vpow.pop %v683
    %v685 = vadd.f32 %v684, 1.0
    %v686 = vrcp.pop %v685
    %v687 = vmul.f32 %v685, %v686
    %v688 = vsub.f32 1.0, %v687
    %v689 = vmul.f32 %v686, %v688
    %v690 = vadd.f32 %v686, %v689
    %vm691 = vweird.f32 %v685
    %vm692 = vweird.f32 %v686
    %vm693 = vmor %vm691, %vm692
    %v694 = vsel %vm693, %v686, %v690
    %v695 = vand.u32 2147483647, %v685
    %vm696 = vcmp.eq.f32.partialorder %v695, 8.507059e+37
    %v697 = vand.u32 %v685, 2147483648
    %v698 = vor.u32 1.1754944e-38, %v697
    %v699 = vsel %vm696, %v698, %v694
    %v700 = vmul.f32 1.0, %v699
    %v701 = vtanh.pop %v635
    %v702 = vtanh.pop %v662
    %v703 = vmul.f32 %v681, %v573
    %705 = vrot.lane.b32.xlu0 %v701, 104
    %v706 = vpop.permute.xlu0 %705
    %v708 = vmul.f32 %v681, %v706
    %710 = vrot.lane.b32.xlu0 %v708, 8
    %v711 = vpop.permute.xlu0 %710
    %v713 = vadd.f32 %v703, %v711
    %v714 = vmul.f32 %v700, %v584
    %716 = vrot.lane.b32.xlu0 %v702, 104
    %v717 = vpop.permute.xlu0 %716
    %v719 = vmul.f32 %v700, %v717
    %721 = vrot.lane.b32.xlu0 %v719, 8
    %v722 = vpop.permute.xlu0 %721
    %v724 = vadd.f32 %v714, %v722
    %v725 = vtanh.pop %v713
    %727 = vrot.lane.b32.xlu0 %v725, 8
    %v728 = vpop.permute.xlu0 %727
    %v730 = vmul.f32 %v681, %v728
    %v731 = vtanh.pop %v724
    %733 = vrot.lane.b32.xlu0 %v731, 8
    %v734 = vpop.permute.xlu0 %733
    %v736 = vmul.f32 %v700, %v734
    %738 = vrot.lane.b32.xlu0 %v730, 112
    %v739 = vpop.permute.xlu0 %738
    %s741 = scalar_lea.vmem [#allocation4], 4
    %742 = vst.msk [vmem:[%s741] sm:$0x3] %vm461, %v739
    %744 = vrot.lane.b32.xlu0 %v736, 112
    %v745 = vpop.permute.xlu0 %744
    %s747 = scalar_lea.vmem [#allocation5], 10
    %748 = vst.msk [vmem:[%s747] sm:$0x3] %vm461, %v745
    %s749 = scalar_lea.vmem [#allocation2], 6
    %v750 = vld [vmem:[%s749] sm:$0x3]
    %v751 = vpack.c.bf16 %v730, %v730
    %v752 = vld [vmem:[#allocation14] sm:$0xf]
    %754 = vrot.lane.b32.xlu0 %v751, 112
    %v755 = vpop.permute.xlu0 %754
    %v757 = vsel %vm328, %v755, 0
    %v760 = vsel %vm332, %v752, 0
    %762 = vmatpush.bf16.msra.mxu0 0
    %763 = vmatpush.bf16.msra.mxu0 0
    %764 = vmatpush.bf16.msra.mxu0 0
    %765 = vmatpush.bf16.msra.mxu0 0
    %766 = vmatpush.bf16.msra.mxu0 0
    %767 = vmatpush.bf16.msra.mxu0 0
    %768 = vmatpush.bf16.msra.mxu0 0
    %769 = vmatpush.bf16.msra.mxu0 %v760
    %770 = vmatmul.bf16.gmra.mxu0 %v757
    %v771 = vpop.f32.mrf.mxu0
    %v772 = vadd.f32 0.0, %v771
    %v773 = vpop.f32.mrf.mxu0
    %774 = vdwg.mxu0
    %v775 = vadd.f32 %v750, %v772
    %s776 = scalar_lea.vmem [#allocation3], 8
    %v777 = vld [vmem:[%s776] sm:$0x3]
    %v778 = vpack.c.bf16 %v736, %v736
    %v779 = vld [vmem:[%s353] sm:$0xf]
    %781 = vrot.lane.b32.xlu0 %v778, 112
    %v782 = vpop.permute.xlu0 %781
    %v784 = vsel %vm328, %v782, 0
    %v787 = vsel %vm332, %v779, 0
    %789 = vmatpush.bf16.msra.mxu0 0
    %790 = vmatpush.bf16.msra.mxu0 0
    %791 = vmatpush.bf16.msra.mxu0 0
    %792 = vmatpush.bf16.msra.mxu0 0
    %793 = vmatpush.bf16.msra.mxu0 0
    %794 = vmatpush.bf16.msra.mxu0 0
    %795 = vmatpush.bf16.msra.mxu0 0
    %796 = vmatpush.bf16.msra.mxu0 %v787
    %797 = vmatmul.bf16.gmra.mxu0 %v784
    %v798 = vpop.f32.mrf.mxu0
    %v799 = vadd.f32 0.0, %v798
    %v800 = vpop.f32.mrf.mxu0
    %801 = vdwg.mxu0
    %v802 = vadd.f32 %v777, %v799
    %v803 = vxor.u32 %v775, 2147483648
    %v804 = vmul.f32 %v803, 1.442695
    %v805 = vpow.pop %v804
    %v806 = vadd.f32 %v805, 1.0
    %v807 = vrcp.pop %v806
    %v808 = vmul.f32 %v806, %v807
    %v809 = vsub.f32 1.0, %v808
    %v810 = vmul.f32 %v807, %v809
    %v811 = vadd.f32 %v807, %v810
    %vm812 = vweird.f32 %v806
    %vm813 = vweird.f32 %v807
    %vm814 = vmor %vm812, %vm813
    %v815 = vsel %vm814, %v807, %v811
    %v816 = vand.u32 2147483647, %v806
    %vm817 = vcmp.eq.f32.partialorder %v816, 8.507059e+37
    %v818 = vand.u32 %v806, 2147483648
    %v819 = vor.u32 1.1754944e-38, %v818
    %v820 = vsel %vm817, %v819, %v815
    %v821 = vmul.f32 1.0, %v820
    %v822 = vxor.u32 %v802, 2147483648
    %v823 = vmul.f32 %v822, 1.442695
    %v824 = vpow.pop %v823
    %v825 = vadd.f32 %v824, 1.0
    %v826 = vrcp.pop %v825
    %v827 = vmul.f32 %v825, %v826
    %v828 = vsub.f32 1.0, %v827
    %v829 = vmul.f32 %v826, %v828
    %v830 = vadd.f32 %v826, %v829
    %vm831 = vweird.f32 %v825
    %vm832 = vweird.f32 %v826
    %vm833 = vmor %vm831, %vm832
    %v834 = vsel %vm833, %v826, %v830
    %v835 = vand.u32 2147483647, %v825
    %vm836 = vcmp.eq.f32.partialorder %v835, 8.507059e+37
    %v837 = vand.u32 %v825, 2147483648
    %v838 = vor.u32 1.1754944e-38, %v837
    %v839 = vsel %vm836, %v838, %v834
    %v840 = vmul.f32 1.0, %v839
    %v841 = vtanh.pop %v775
    %v842 = vtanh.pop %v802
    %v843 = vmul.f32 %v821, %v713
    %845 = vrot.lane.b32.xlu0 %v841, 104
    %v846 = vpop.permute.xlu0 %845
    %v848 = vmul.f32 %v821, %v846
    %850 = vrot.lane.b32.xlu0 %v848, 8
    %v851 = vpop.permute.xlu0 %850
    %v853 = vadd.f32 %v843, %v851
    %v854 = vmul.f32 %v840, %v724
    %856 = vrot.lane.b32.xlu0 %v842, 104
    %v857 = vpop.permute.xlu0 %856
    %v859 = vmul.f32 %v840, %v857
    %861 = vrot.lane.b32.xlu0 %v859, 8
    %v862 = vpop.permute.xlu0 %861
    %v864 = vadd.f32 %v854, %v862
    %v865 = vtanh.pop %v853
    %867 = vrot.lane.b32.xlu0 %v865, 8
    %v868 = vpop.permute.xlu0 %867
    %v870 = vmul.f32 %v821, %v868
    %v871 = vtanh.pop %v864
    %873 = vrot.lane.b32.xlu0 %v871, 8
    %v874 = vpop.permute.xlu0 %873
    %v876 = vmul.f32 %v840, %v874
    %878 = vrot.lane.b32.xlu0 %v870, 112
    %v879 = vpop.permute.xlu0 %878
    %s881 = scalar_lea.vmem [#allocation4], 6
    %882 = vst.msk [vmem:[%s881] sm:$0x3] %vm461, %v879
    %884 = vrot.lane.b32.xlu0 %v876, 112
    %v885 = vpop.permute.xlu0 %884
    %s887 = scalar_lea.vmem [#allocation5], 8
    %888 = vst.msk [vmem:[%s887] sm:$0x3] %vm461, %v885
    %s889 = scalar_lea.vmem [#allocation2], 8
    %v890 = vld [vmem:[%s889] sm:$0x3]
    %v891 = vpack.c.bf16 %v870, %v870
    %v892 = vld [vmem:[#allocation14] sm:$0xf]
    %894 = vrot.lane.b32.xlu0 %v891, 112
    %v895 = vpop.permute.xlu0 %894
    %v897 = vsel %vm328, %v895, 0
    %v900 = vsel %vm332, %v892, 0
    %902 = vmatpush.bf16.msra.mxu0 0
    %903 = vmatpush.bf16.msra.mxu0 0
    %904 = vmatpush.bf16.msra.mxu0 0
    %905 = vmatpush.bf16.msra.mxu0 0
    %906 = vmatpush.bf16.msra.mxu0 0
    %907 = vmatpush.bf16.msra.mxu0 0
    %908 = vmatpush.bf16.msra.mxu0 0
    %909 = vmatpush.bf16.msra.mxu0 %v900
    %910 = vmatmul.bf16.gmra.mxu0 %v897
    %v911 = vpop.f32.mrf.mxu0
    %v912 = vadd.f32 0.0, %v911
    %v913 = vpop.f32.mrf.mxu0
    %914 = vdwg.mxu0
    %v915 = vadd.f32 %v890, %v912
    %s916 = scalar_lea.vmem [#allocation3], 6
    %v917 = vld [vmem:[%s916] sm:$0x3]
    %v918 = vpack.c.bf16 %v876, %v876
    %v919 = vld [vmem:[%s353] sm:$0xf]
    %921 = vrot.lane.b32.xlu0 %v918, 112
    %v922 = vpop.permute.xlu0 %921
    %v924 = vsel %vm328, %v922, 0
    %v927 = vsel %vm332, %v919, 0
    %929 = vmatpush.bf16.msra.mxu0 0
    %930 = vmatpush.bf16.msra.mxu0 0
    %931 = vmatpush.bf16.msra.mxu0 0
    %932 = vmatpush.bf16.msra.mxu0 0
    %933 = vmatpush.bf16.msra.mxu0 0
    %934 = vmatpush.bf16.msra.mxu0 0
    %935 = vmatpush.bf16.msra.mxu0 0
    %936 = vmatpush.bf16.msra.mxu0 %v927
    %937 = vmatmul.bf16.gmra.mxu0 %v924
    %v938 = vpop.f32.mrf.mxu0
    %v939 = vadd.f32 0.0, %v938
    %v940 = vpop.f32.mrf.mxu0
    %941 = vdwg.mxu0
    %v942 = vadd.f32 %v917, %v939
    %v943 = vxor.u32 %v915, 2147483648
    %v944 = vmul.f32 %v943, 1.442695
    %v945 = vpow.pop %v944
    %v946 = vadd.f32 %v945, 1.0
    %v947 = vrcp.pop %v946
    %v948 = vmul.f32 %v946, %v947
    %v949 = vsub.f32 1.0, %v948
    %v950 = vmul.f32 %v947, %v949
    %v951 = vadd.f32 %v947, %v950
    %vm952 = vweird.f32 %v946
    %vm953 = vweird.f32 %v947
    %vm954 = vmor %vm952, %vm953
    %v955 = vsel %vm954, %v947, %v951
    %v956 = vand.u32 2147483647, %v946
    %vm957 = vcmp.eq.f32.partialorder %v956, 8.507059e+37
    %v958 = vand.u32 %v946, 2147483648
    %v959 = vor.u32 1.1754944e-38, %v958
    %v960 = vsel %vm957, %v959, %v955
    %v961 = vmul.f32 1.0, %v960
    %v962 = vxor.u32 %v942, 2147483648
    %v963 = vmul.f32 %v962, 1.442695
    %v964 = vpow.pop %v963
    %v965 = vadd.f32 %v964, 1.0
    %v966 = vrcp.pop %v965
    %v967 = vmul.f32 %v965, %v966
    %v968 = vsub.f32 1.0, %v967
    %v969 = vmul.f32 %v966, %v968
    %v970 = vadd.f32 %v966, %v969
    %vm971 = vweird.f32 %v965
    %vm972 = vweird.f32 %v966
    %vm973 = vmor %vm971, %vm972
    %v974 = vsel %vm973, %v966, %v970
    %v975 = vand.u32 2147483647, %v965
    %vm976 = vcmp.eq.f32.partialorder %v975, 8.507059e+37
    %v977 = vand.u32 %v965, 2147483648
    %v978 = vor.u32 1.1754944e-38, %v977
    %v979 = vsel %vm976, %v978, %v974
    %v980 = vmul.f32 1.0, %v979
    %v981 = vtanh.pop %v915
    %v982 = vtanh.pop %v942
    %v983 = vmul.f32 %v961, %v853
    %985 = vrot.lane.b32.xlu0 %v981, 104
    %v986 = vpop.permute.xlu0 %985
    %v988 = vmul.f32 %v961, %v986
    %990 = vrot.lane.b32.xlu0 %v988, 8
    %v991 = vpop.permute.xlu0 %990
    %v993 = vadd.f32 %v983, %v991
    %v994 = vmul.f32 %v980, %v864
    %996 = vrot.lane.b32.xlu0 %v982, 104
    %v997 = vpop.permute.xlu0 %996
    %v999 = vmul.f32 %v980, %v997
    %1001 = vrot.lane.b32.xlu0 %v999, 8
    %v1002 = vpop.permute.xlu0 %1001
    %v1004 = vadd.f32 %v994, %v1002
    %v1005 = vtanh.pop %v993
    %1007 = vrot.lane.b32.xlu0 %v1005, 8
    %v1008 = vpop.permute.xlu0 %1007
    %v1010 = vmul.f32 %v961, %v1008
    %v1011 = vtanh.pop %v1004
    %1013 = vrot.lane.b32.xlu0 %v1011, 8
    %v1014 = vpop.permute.xlu0 %1013
    %v1016 = vmul.f32 %v980, %v1014
    %1018 = vrot.lane.b32.xlu0 %v1010, 112
    %v1019 = vpop.permute.xlu0 %1018
    %s1021 = scalar_lea.vmem [#allocation4], 8
    %1022 = vst.msk [vmem:[%s1021] sm:$0x3] %vm461, %v1019
    %1024 = vrot.lane.b32.xlu0 %v1016, 112
    %v1025 = vpop.permute.xlu0 %1024
    %s1027 = scalar_lea.vmem [#allocation5], 6
    %1028 = vst.msk [vmem:[%s1027] sm:$0x3] %vm461, %v1025
    %s1029 = scalar_lea.vmem [#allocation2], 10
    %v1030 = vld [vmem:[%s1029] sm:$0x3]
    %v1031 = vpack.c.bf16 %v1010, %v1010
    %v1032 = vld [vmem:[#allocation14] sm:$0xf]
    %1034 = vrot.lane.b32.xlu0 %v1031, 112
    %v1035 = vpop.permute.xlu0 %1034
    %v1037 = vsel %vm328, %v1035, 0
    %v1040 = vsel %vm332, %v1032, 0
    %1042 = vmatpush.bf16.msra.mxu0 0
    %1043 = vmatpush.bf16.msra.mxu0 0
    %1044 = vmatpush.bf16.msra.mxu0 0
    %1045 = vmatpush.bf16.msra.mxu0 0
    %1046 = vmatpush.bf16.msra.mxu0 0
    %1047 = vmatpush.bf16.msra.mxu0 0
    %1048 = vmatpush.bf16.msra.mxu0 0
    %1049 = vmatpush.bf16.msra.mxu0 %v1040
    %1050 = vmatmul.bf16.gmra.mxu0 %v1037
    %v1051 = vpop.f32.mrf.mxu0
    %v1052 = vadd.f32 0.0, %v1051
    %v1053 = vpop.f32.mrf.mxu0
    %1054 = vdwg.mxu0
    %v1055 = vadd.f32 %v1030, %v1052
    %s1056 = scalar_lea.vmem [#allocation3], 4
    %v1057 = vld [vmem:[%s1056] sm:$0x3]
    %v1058 = vpack.c.bf16 %v1016, %v1016
    %v1059 = vld [vmem:[%s353] sm:$0xf]
    %1061 = vrot.lane.b32.xlu0 %v1058, 112
    %v1062 = vpop.permute.xlu0 %1061
    %v1064 = vsel %vm328, %v1062, 0
    %v1067 = vsel %vm332, %v1059, 0
    %1069 = vmatpush.bf16.msra.mxu0 0
    %1070 = vmatpush.bf16.msra.mxu0 0
    %1071 = vmatpush.bf16.msra.mxu0 0
    %1072 = vmatpush.bf16.msra.mxu0 0
    %1073 = vmatpush.bf16.msra.mxu0 0
    %1074 = vmatpush.bf16.msra.mxu0 0
    %1075 = vmatpush.bf16.msra.mxu0 0
    %1076 = vmatpush.bf16.msra.mxu0 %v1067
    %1077 = vmatmul.bf16.gmra.mxu0 %v1064
    %v1078 = vpop.f32.mrf.mxu0
    %v1079 = vadd.f32 0.0, %v1078
    %v1080 = vpop.f32.mrf.mxu0
    %1081 = vdwg.mxu0
    %v1082 = vadd.f32 %v1057, %v1079
    %v1083 = vxor.u32 %v1055, 2147483648
    %v1084 = vmul.f32 %v1083, 1.442695
    %v1085 = vpow.pop %v1084
    %v1086 = vadd.f32 %v1085, 1.0
    %v1087 = vrcp.pop %v1086
    %v1088 = vmul.f32 %v1086, %v1087
    %v1089 = vsub.f32 1.0, %v1088
    %v1090 = vmul.f32 %v1087, %v1089
    %v1091 = vadd.f32 %v1087, %v1090
    %vm1092 = vweird.f32 %v1086
    %vm1093 = vweird.f32 %v1087
    %vm1094 = vmor %vm1092, %vm1093
    %v1095 = vsel %vm1094, %v1087, %v1091
    %v1096 = vand.u32 2147483647, %v1086
    %vm1097 = vcmp.eq.f32.partialorder %v1096, 8.507059e+37
    %v1098 = vand.u32 %v1086, 2147483648
    %v1099 = vor.u32 1.1754944e-38, %v1098
    %v1100 = vsel %vm1097, %v1099, %v1095
    %v1101 = vmul.f32 1.0, %v1100
    %v1102 = vxor.u32 %v1082, 2147483648
    %v1103 = vmul.f32 %v1102, 1.442695
    %v1104 = vpow.pop %v1103
    %v1105 = vadd.f32 %v1104, 1.0
    %v1106 = vrcp.pop %v1105
    %v1107 = vmul.f32 %v1105, %v1106
    %v1108 = vsub.f32 1.0, %v1107
    %v1109 = vmul.f32 %v1106, %v1108
    %v1110 = vadd.f32 %v1106, %v1109
    %vm1111 = vweird.f32 %v1105
    %vm1112 = vweird.f32 %v1106
    %vm1113 = vmor %vm1111, %vm1112
    %v1114 = vsel %vm1113, %v1106, %v1110
    %v1115 = vand.u32 2147483647, %v1105
    %vm1116 = vcmp.eq.f32.partialorder %v1115, 8.507059e+37
    %v1117 = vand.u32 %v1105, 2147483648
    %v1118 = vor.u32 1.1754944e-38, %v1117
    %v1119 = vsel %vm1116, %v1118, %v1114
    %v1120 = vmul.f32 1.0, %v1119
    %v1121 = vtanh.pop %v1055
    %v1122 = vtanh.pop %v1082
    %v1123 = vmul.f32 %v1101, %v993
    %1125 = vrot.lane.b32.xlu0 %v1121, 104
    %v1126 = vpop.permute.xlu0 %1125
    %v1128 = vmul.f32 %v1101, %v1126
    %1130 = vrot.lane.b32.xlu0 %v1128, 8
    %v1131 = vpop.permute.xlu0 %1130
    %v1133 = vadd.f32 %v1123, %v1131
    %v1134 = vmul.f32 %v1120, %v1004
    %1136 = vrot.lane.b32.xlu0 %v1122, 104
    %v1137 = vpop.permute.xlu0 %1136
    %v1139 = vmul.f32 %v1120, %v1137
    %1141 = vrot.lane.b32.xlu0 %v1139, 8
    %v1142 = vpop.permute.xlu0 %1141
    %v1144 = vadd.f32 %v1134, %v1142
    %v1145 = vtanh.pop %v1133
    %1147 = vrot.lane.b32.xlu0 %v1145, 8
    %v1148 = vpop.permute.xlu0 %1147
    %v1150 = vmul.f32 %v1101, %v1148
    %v1151 = vtanh.pop %v1144
    %1153 = vrot.lane.b32.xlu0 %v1151, 8
    %v1154 = vpop.permute.xlu0 %1153
    %v1156 = vmul.f32 %v1120, %v1154
    %1158 = vrot.lane.b32.xlu0 %v1150, 112
    %v1159 = vpop.permute.xlu0 %1158
    %s1161 = scalar_lea.vmem [#allocation4], 10
    %1162 = vst.msk [vmem:[%s1161] sm:$0x3] %vm461, %v1159
    %1164 = vrot.lane.b32.xlu0 %v1156, 112
    %v1165 = vpop.permute.xlu0 %1164
    %s1167 = scalar_lea.vmem [#allocation5], 4
    %1168 = vst.msk [vmem:[%s1167] sm:$0x3] %vm461, %v1165
    %s1169 = scalar_lea.vmem [#allocation2], 12
    %v1170 = vld [vmem:[%s1169] sm:$0x3]
    %v1171 = vpack.c.bf16 %v1150, %v1150
    %v1172 = vld [vmem:[#allocation14] sm:$0xf]
    %1174 = vrot.lane.b32.xlu0 %v1171, 112
    %v1175 = vpop.permute.xlu0 %1174
    %v1177 = vsel %vm328, %v1175, 0
    %v1180 = vsel %vm332, %v1172, 0
    %1182 = vmatpush.bf16.msra.mxu0 0
    %1183 = vmatpush.bf16.msra.mxu0 0
    %1184 = vmatpush.bf16.msra.mxu0 0
    %1185 = vmatpush.bf16.msra.mxu0 0
    %1186 = vmatpush.bf16.msra.mxu0 0
    %1187 = vmatpush.bf16.msra.mxu0 0
    %1188 = vmatpush.bf16.msra.mxu0 0
    %1189 = vmatpush.bf16.msra.mxu0 %v1180
    %1190 = vmatmul.bf16.gmra.mxu0 %v1177
    %v1191 = vpop.f32.mrf.mxu0
    %v1192 = vadd.f32 0.0, %v1191
    %v1193 = vpop.f32.mrf.mxu0
    %1194 = vdwg.mxu0
    %v1195 = vadd.f32 %v1170, %v1192
    %s1196 = scalar_lea.vmem [#allocation3], 2
    %v1197 = vld [vmem:[%s1196] sm:$0x3]
    %v1198 = vpack.c.bf16 %v1156, %v1156
    %v1199 = vld [vmem:[%s353] sm:$0xf]
    %1201 = vrot.lane.b32.xlu0 %v1198, 112
    %v1202 = vpop.permute.xlu0 %1201
    %v1204 = vsel %vm328, %v1202, 0
    %v1207 = vsel %vm332, %v1199, 0
    %1209 = vmatpush.bf16.msra.mxu0 0
    %1210 = vmatpush.bf16.msra.mxu0 0
    %1211 = vmatpush.bf16.msra.mxu0 0
    %1212 = vmatpush.bf16.msra.mxu0 0
    %1213 = vmatpush.bf16.msra.mxu0 0
    %1214 = vmatpush.bf16.msra.mxu0 0
    %1215 = vmatpush.bf16.msra.mxu0 0
    %1216 = vmatpush.bf16.msra.mxu0 %v1207
    %1217 = vmatmul.bf16.gmra.mxu0 %v1204
    %v1218 = vpop.f32.mrf.mxu0
    %v1219 = vadd.f32 0.0, %v1218
    %v1220 = vpop.f32.mrf.mxu0
    %1221 = vdwg.mxu0
    %v1222 = vadd.f32 %v1197, %v1219
    %v1223 = vxor.u32 %v1195, 2147483648
    %v1224 = vmul.f32 %v1223, 1.442695
    %v1225 = vpow.pop %v1224
    %v1226 = vadd.f32 %v1225, 1.0
    %v1227 = vrcp.pop %v1226
    %v1228 = vmul.f32 %v1226, %v1227
    %v1229 = vsub.f32 1.0, %v1228
    %v1230 = vmul.f32 %v1227, %v1229
    %v1231 = vadd.f32 %v1227, %v1230
    %vm1232 = vweird.f32 %v1226
    %vm1233 = vweird.f32 %v1227
    %vm1234 = vmor %vm1232, %vm1233
    %v1235 = vsel %vm1234, %v1227, %v1231
    %v1236 = vand.u32 2147483647, %v1226
    %vm1237 = vcmp.eq.f32.partialorder %v1236, 8.507059e+37
    %v1238 = vand.u32 %v1226, 2147483648
    %v1239 = vor.u32 1.1754944e-38, %v1238
    %v1240 = vsel %vm1237, %v1239, %v1235
    %v1241 = vmul.f32 1.0, %v1240
    %v1242 = vxor.u32 %v1222, 2147483648
    %v1243 = vmul.f32 %v1242, 1.442695
    %v1244 = vpow.pop %v1243
    %v1245 = vadd.f32 %v1244, 1.0
    %v1246 = vrcp.pop %v1245
    %v1247 = vmul.f32 %v1245, %v1246
    %v1248 = vsub.f32 1.0, %v1247
    %v1249 = vmul.f32 %v1246, %v1248
    %v1250 = vadd.f32 %v1246, %v1249
    %vm1251 = vweird.f32 %v1245
    %vm1252 = vweird.f32 %v1246
    %vm1253 = vmor %vm1251, %vm1252
    %v1254 = vsel %vm1253, %v1246, %v1250
    %v1255 = vand.u32 2147483647, %v1245
    %vm1256 = vcmp.eq.f32.partialorder %v1255, 8.507059e+37
    %v1257 = vand.u32 %v1245, 2147483648
    %v1258 = vor.u32 1.1754944e-38, %v1257
    %v1259 = vsel %vm1256, %v1258, %v1254
    %v1260 = vmul.f32 1.0, %v1259
    %v1261 = vtanh.pop %v1195
    %v1262 = vtanh.pop %v1222
    %v1263 = vmul.f32 %v1241, %v1133
    %1265 = vrot.lane.b32.xlu0 %v1261, 104
    %v1266 = vpop.permute.xlu0 %1265
    %v1268 = vmul.f32 %v1241, %v1266
    %1270 = vrot.lane.b32.xlu0 %v1268, 8
    %v1271 = vpop.permute.xlu0 %1270
    %v1273 = vadd.f32 %v1263, %v1271
    %v1274 = vmul.f32 %v1260, %v1144
    %1276 = vrot.lane.b32.xlu0 %v1262, 104
    %v1277 = vpop.permute.xlu0 %1276
    %v1279 = vmul.f32 %v1260, %v1277
    %1281 = vrot.lane.b32.xlu0 %v1279, 8
    %v1282 = vpop.permute.xlu0 %1281
    %v1284 = vadd.f32 %v1274, %v1282
    %v1285 = vtanh.pop %v1273
    %1287 = vrot.lane.b32.xlu0 %v1285, 8
    %v1288 = vpop.permute.xlu0 %1287
    %v1290 = vmul.f32 %v1241, %v1288
    %v1291 = vtanh.pop %v1284
    %1293 = vrot.lane.b32.xlu0 %v1291, 8
    %v1294 = vpop.permute.xlu0 %1293
    %v1296 = vmul.f32 %v1260, %v1294
    %1298 = vrot.lane.b32.xlu0 %v1290, 112
    %v1299 = vpop.permute.xlu0 %1298
    %s1301 = scalar_lea.vmem [#allocation4], 12
    %1302 = vst.msk [vmem:[%s1301] sm:$0x3] %vm461, %v1299
    %1304 = vrot.lane.b32.xlu0 %v1296, 112
    %v1305 = vpop.permute.xlu0 %1304
    %s1307 = scalar_lea.vmem [#allocation5], 2
    %1308 = vst.msk [vmem:[%s1307] sm:$0x3] %vm461, %v1305
    %s1309 = scalar_lea.vmem [#allocation2], 14
    %v1310 = vld [vmem:[%s1309] sm:$0x3]
    %v1311 = vpack.c.bf16 %v1290, %v1290
    %v1312 = vld [vmem:[#allocation14] sm:$0xf]
    %1314 = vrot.lane.b32.xlu0 %v1311, 112
    %v1315 = vpop.permute.xlu0 %1314
    %v1317 = vsel %vm328, %v1315, 0
    %v1320 = vsel %vm332, %v1312, 0
    %1322 = vmatpush.bf16.msra.mxu0 0
    %1323 = vmatpush.bf16.msra.mxu0 0
    %1324 = vmatpush.bf16.msra.mxu0 0
    %1325 = vmatpush.bf16.msra.mxu0 0
    %1326 = vmatpush.bf16.msra.mxu0 0
    %1327 = vmatpush.bf16.msra.mxu0 0
    %1328 = vmatpush.bf16.msra.mxu0 0
    %1329 = vmatpush.bf16.msra.mxu0 %v1320
    %1330 = vmatmul.bf16.gmra.mxu0 %v1317
    %v1331 = vpop.f32.mrf.mxu0
    %v1332 = vadd.f32 0.0, %v1331
    %v1333 = vpop.f32.mrf.mxu0
    %1334 = vdwg.mxu0
    %v1335 = vadd.f32 %v1310, %v1332
    %v1336 = vld [vmem:[#allocation3] sm:$0x3]
    %v1337 = vpack.c.bf16 %v1296, %v1296
    %v1338 = vld [vmem:[%s353] sm:$0xf]
    %1340 = vrot.lane.b32.xlu0 %v1337, 112
    %v1341 = vpop.permute.xlu0 %1340
    %v1343 = vsel %vm328, %v1341, 0
    %v1346 = vsel %vm332, %v1338, 0
    %1348 = vmatpush.bf16.msra.mxu0 0
    %1349 = vmatpush.bf16.msra.mxu0 0
    %1350 = vmatpush.bf16.msra.mxu0 0
    %1351 = vmatpush.bf16.msra.mxu0 0
    %1352 = vmatpush.bf16.msra.mxu0 0
    %1353 = vmatpush.bf16.msra.mxu0 0
    %1354 = vmatpush.bf16.msra.mxu0 0
    %1355 = vmatpush.bf16.msra.mxu0 %v1346
    %1356 = vmatmul.bf16.gmra.mxu0 %v1343
    %v1357 = vpop.f32.mrf.mxu0
    %v1358 = vadd.f32 0.0, %v1357
    %v1359 = vpop.f32.mrf.mxu0
    %1360 = vdwg.mxu0
    %v1361 = vadd.f32 %v1336, %v1358
    %v1362 = vxor.u32 %v1335, 2147483648
    %v1363 = vmul.f32 %v1362, 1.442695
    %v1364 = vpow.pop %v1363
    %v1365 = vadd.f32 %v1364, 1.0
    %v1366 = vrcp.pop %v1365
    %v1367 = vmul.f32 %v1365, %v1366
    %v1368 = vsub.f32 1.0, %v1367
    %v1369 = vmul.f32 %v1366, %v1368
    %v1370 = vadd.f32 %v1366, %v1369
    %vm1371 = vweird.f32 %v1365
    %vm1372 = vweird.f32 %v1366
    %vm1373 = vmor %vm1371, %vm1372
    %v1374 = vsel %vm1373, %v1366, %v1370
    %v1375 = vand.u32 2147483647, %v1365
    %vm1376 = vcmp.eq.f32.partialorder %v1375, 8.507059e+37
    %v1377 = vand.u32 %v1365, 2147483648
    %v1378 = vor.u32 1.1754944e-38, %v1377
    %v1379 = vsel %vm1376, %v1378, %v1374
    %v1380 = vmul.f32 1.0, %v1379
    %v1381 = vxor.u32 %v1361, 2147483648
    %v1382 = vmul.f32 %v1381, 1.442695
    %v1383 = vpow.pop %v1382
    %v1384 = vadd.f32 %v1383, 1.0
    %v1385 = vrcp.pop %v1384
    %v1386 = vmul.f32 %v1384, %v1385
    %v1387 = vsub.f32 1.0, %v1386
    %v1388 = vmul.f32 %v1385, %v1387
    %v1389 = vadd.f32 %v1385, %v1388
    %vm1390 = vweird.f32 %v1384
    %vm1391 = vweird.f32 %v1385
    %vm1392 = vmor %vm1390, %vm1391
    %v1393 = vsel %vm1392, %v1385, %v1389
    %v1394 = vand.u32 2147483647, %v1384
    %vm1395 = vcmp.eq.f32.partialorder %v1394, 8.507059e+37
    %v1396 = vand.u32 %v1384, 2147483648
    %v1397 = vor.u32 1.1754944e-38, %v1396
    %v1398 = vsel %vm1395, %v1397, %v1393
    %v1399 = vmul.f32 1.0, %v1398
    %v1400 = vtanh.pop %v1335
    %v1401 = vtanh.pop %v1361
    %v1402 = vmul.f32 %v1380, %v1273
    %1404 = vrot.lane.b32.xlu0 %v1400, 104
    %v1405 = vpop.permute.xlu0 %1404
    %v1407 = vmul.f32 %v1380, %v1405
    %1409 = vrot.lane.b32.xlu0 %v1407, 8
    %v1410 = vpop.permute.xlu0 %1409
    %v1412 = vadd.f32 %v1402, %v1410
    %v1413 = vmul.f32 %v1399, %v1284
    %1415 = vrot.lane.b32.xlu0 %v1401, 104
    %v1416 = vpop.permute.xlu0 %1415
    %v1418 = vmul.f32 %v1399, %v1416
    %1420 = vrot.lane.b32.xlu0 %v1418, 8
    %v1421 = vpop.permute.xlu0 %1420
    %v1423 = vadd.f32 %v1413, %v1421
    %v1424 = vtanh.pop %v1412
    %1426 = vrot.lane.b32.xlu0 %v1424, 8
    %v1427 = vpop.permute.xlu0 %1426
    %v1429 = vmul.f32 %v1380, %v1427
    %v1430 = vtanh.pop %v1423
    %1432 = vrot.lane.b32.xlu0 %v1430, 8
    %v1433 = vpop.permute.xlu0 %1432
    %v1435 = vmul.f32 %v1399, %v1433
    %1437 = vrot.lane.b32.xlu0 %v1429, 112
    %v1438 = vpop.permute.xlu0 %1437
    %s1440 = scalar_lea.vmem [#allocation4], 14
    %1441 = vst.msk [vmem:[%s1440] sm:$0x3] %vm461, %v1438
    %1443 = vrot.lane.b32.xlu0 %v1435, 112
    %v1444 = vpop.permute.xlu0 %1443
    %1446 = vst.msk [vmem:[#allocation5] sm:$0x3] %vm461, %v1444
    %1447 = vst.msk [vmem:[#allocation6] sm:$0x3] %vm461, %v1438
    %1449 = vrot.lane.b32.xlu0 %v1412, 120
    %v1450 = vpop.permute.xlu0 %1449
    %1452 = vst.msk [vmem:[#allocation7] sm:$0x3] %vm461, %v1450
    %1453 = vst.msk [vmem:[%s321] sm:$0x3] %vm461, %v1444
    %1455 = vrot.lane.b32.xlu0 %v1423, 120
    %v1456 = vpop.permute.xlu0 %1455
    %1458 = vst.msk [vmem:[%s323] sm:$0x3] %vm461, %v1456
    %v1459 = vld [vmem:[#allocation4] sm:$0x3]
    %v1460 = vld [vmem:[#allocation4 + $0x2] sm:$0x3]
    %v1461 = vld [vmem:[#allocation4 + $0x4] sm:$0x3]
    %v1462 = vld [vmem:[#allocation4 + $0x6] sm:$0x3]
    %v1463 = vld [vmem:[#allocation4 + $0x8] sm:$0x3]
    %v1464 = vld [vmem:[#allocation4 + $0xa] sm:$0x3]
    %v1465 = vld [vmem:[#allocation4 + $0xc] sm:$0x3]
    %v1466 = vld [vmem:[#allocation4 + $0xe] sm:$0x3]
    %v1467 = vrot.slane %v1461, 4
    %v1468 = vsel %vm150, %v1467, %v1459
    %v1470 = vunpack.c.l.s4 1983009808
    %v1471 = vunpack.c.0.s8 %v1470
    %v1472 = vperm.slane %v1468, %v1471
    %v1473 = vrot.slane %v1462, 4
    %v1474 = vsel %vm150, %v1473, %v1460
    %v1476 = vunpack.c.l.s4 1983009808
    %v1477 = vunpack.c.0.s8 %v1476
    %v1478 = vperm.slane %v1474, %v1477
    %v1479 = vrot.slane %v1465, 4
    %v1480 = vsel %vm150, %v1479, %v1463
    %v1482 = vunpack.c.l.s4 1983009808
    %v1483 = vunpack.c.0.s8 %v1482
    %v1484 = vperm.slane %v1480, %v1483
    %v1485 = vrot.slane %v1466, 4
    %v1486 = vsel %vm150, %v1485, %v1464
    %v1488 = vunpack.c.l.s4 1983009808
    %v1489 = vunpack.c.0.s8 %v1488
    %v1490 = vperm.slane %v1486, %v1489
    %v1491 = vrot.slane %v1478, 4
    %v1492 = vsel %vm150, %v1491, %v1472
    %v1494 = vunpack.c.l.s4 1934713408
    %v1495 = vunpack.c.0.s8 %v1494
    %v1496 = vperm.slane %v1492, %v1495
    %v1497 = vrot.slane %v1490, 4
    %v1498 = vsel %vm150, %v1497, %v1484
    %v1500 = vunpack.c.l.s4 1934713408
    %v1501 = vunpack.c.0.s8 %v1500
    %v1502 = vperm.slane %v1498, %v1501
    %v1503 = vrot.slane %v1502, 4
    %v1504 = vsel %vm150, %v1503, %v1496
    %v1505 = vrot.slane %v1496, 4
    %v1506 = vsel %vm150, %v1502, %v1505
    %1507 = vst.msk [vmem:[#allocation16] sm:$0xff] %vm328, %v1504
    %1508 = vst.msk [vmem:[#allocation16 + $0x8] sm:$0xff] %vm328, %v1506
    %v1509 = vld [vmem:[#allocation5] sm:$0x3]
    %v1510 = vld [vmem:[#allocation5 + $0x2] sm:$0x3]
    %v1511 = vld [vmem:[#allocation5 + $0x4] sm:$0x3]
    %v1512 = vld [vmem:[#allocation5 + $0x6] sm:$0x3]
    %v1513 = vld [vmem:[#allocation5 + $0x8] sm:$0x3]
    %v1514 = vld [vmem:[#allocation5 + $0xa] sm:$0x3]
    %v1515 = vld [vmem:[#allocation5 + $0xc] sm:$0x3]
    %v1516 = vld [vmem:[#allocation5 + $0xe] sm:$0x3]
    %v1517 = vrot.slane %v1511, 4
    %v1518 = vsel %vm150, %v1517, %v1509
    %v1520 = vunpack.c.l.s4 1983009808
    %v1521 = vunpack.c.0.s8 %v1520
    %v1522 = vperm.slane %v1518, %v1521
    %v1523 = vrot.slane %v1512, 4
    %v1524 = vsel %vm150, %v1523, %v1510
    %v1526 = vunpack.c.l.s4 1983009808
    %v1527 = vunpack.c.0.s8 %v1526
    %v1528 = vperm.slane %v1524, %v1527
    %v1529 = vrot.slane %v1515, 4
    %v1530 = vsel %vm150, %v1529, %v1513
    %v1532 = vunpack.c.l.s4 1983009808
    %v1533 = vunpack.c.0.s8 %v1532
    %v1534 = vperm.slane %v1530, %v1533
    %v1535 = vrot.slane %v1516, 4
    %v1536 = vsel %vm150, %v1535, %v1514
    %v1538 = vunpack.c.l.s4 1983009808
    %v1539 = vunpack.c.0.s8 %v1538
    %v1540 = vperm.slane %v1536, %v1539
    %v1541 = vrot.slane %v1528, 4
    %v1542 = vsel %vm150, %v1541, %v1522
    %v1544 = vunpack.c.l.s4 1934713408
    %v1545 = vunpack.c.0.s8 %v1544
    %v1546 = vperm.slane %v1542, %v1545
    %v1547 = vrot.slane %v1540, 4
    %v1548 = vsel %vm150, %v1547, %v1534
    %v1550 = vunpack.c.l.s4 1934713408
    %v1551 = vunpack.c.0.s8 %v1550
    %v1552 = vperm.slane %v1548, %v1551
    %v1553 = vrot.slane %v1552, 4
    %v1554 = vsel %vm150, %v1553, %v1546
    %v1555 = vrot.slane %v1546, 4
    %v1556 = vsel %vm150, %v1552, %v1555
    %1557 = vst.msk [vmem:[#allocation17] sm:$0xff] %vm328, %v1554
    %1558 = vst.msk [vmem:[#allocation17 + $0x8] sm:$0xff] %vm328, %v1556
    // Predicated region
    $region42: #{tpu_custom_call.1} parent=1 // pred_check
      _
    $region43: #{tpu_custom_call.1} parent=1 // pred_check_branch
      %1560 = sbr.rel (0) target = $region45
    $region44: #{tpu_custom_call.1} parent=1 // pred_region
      %1562 = vsyncadd [#allocation10], 0
      %s1563 = sshll.u32 [#allocation16], 4
      %s1564 = int_to_ptr.vmem [resolvable:$true] %s1563
      %s1565 = sshll.u32 %s5, 4
      %s1566 = int_to_ptr.hbm [resolvable:$true] %s1565
      %1571 = dma.vmem_to_hbm [thread:$0]  %s1564, 256, %s1566, [#allocation10], 128, 128, 8
    $region45: #{tpu_custom_call.1} parent=1 // pred_fallthru
      _
    // Predicated region
    $region46: #{tpu_custom_call.1} parent=1 // pred_check
      _
    $region47: #{tpu_custom_call.1} parent=1 // pred_check_branch
      %1573 = sbr.rel (0) target = $region49
    $region48: #{tpu_custom_call.1} parent=1 // pred_region
      %s1574 = ssub.s32 0, 0
      %1576 = vsyncadd [#allocation18], 0
      %s1577 = smul.addr %s1574, 8
      %s1578 = scalar_lea.hbm %s6, %s1577
      %s1579 = sshll.u32 [#allocation17], 4
      %s1580 = int_to_ptr.vmem [resolvable:$true] %s1579
      %s1581 = sshll.u32 %s1578, 4
      %s1582 = int_to_ptr.hbm [resolvable:$true] %s1581
      %1587 = dma.vmem_to_hbm [thread:$0]  %s1580, 256, %s1582, [#allocation18], 128, 128, 8
    $region49: #{tpu_custom_call.1} parent=1 // pred_fallthru
      _
    // Predicated region
    $region50: #{tpu_custom_call.1} parent=1 // pred_check
      _
    $region51: #{tpu_custom_call.1} parent=1 // pred_check_branch
      %1589 = sbr.rel (0) target = $region53
    $region52: #{tpu_custom_call.1} parent=1 // pred_region
      %1591 = dma.done [#allocation10], 256
    $region53: #{tpu_custom_call.1} parent=1 // pred_fallthru
      _
    // Predicated region
    $region54: #{tpu_custom_call.1} parent=1 // pred_check
      _
    $region55: #{tpu_custom_call.1} parent=1 // pred_check_branch
      %1593 = sbr.rel (0) target = $region57
    $region56: #{tpu_custom_call.1} parent=1 // pred_region
      %1595 = dma.done [#allocation18], 256
    $region57: #{tpu_custom_call.1} parent=1 // pred_fallthru
      _
    %1596 = vsyncpa [#allocation9], 1
    %1597 = vsyncpa [#allocation12], 1
    %1598 = vsyncpa [#allocation15], 1
    %1599 = vsyncpa [#allocation10], 1
    %1600 = vsyncpa [#allocation18], 1

</llo_original>
